<compile_context>
chip_gen: v6e
topology: v6e:2x2x1
jax: 0.10.0
libtpu: 0.0.40
codegen_flags: <defaults>
</compile_context>

<pallas_src>
import jax
import jax.numpy as jnp
from jax.experimental import pallas as pl
from jax.experimental.pallas import tpu as pltpu

# ---------------- model hyper-parameters (small demo sizes) -----------------
B = 2            # batch
L = 8            # sequence length (number of boxes)
H = 32           # hidden size
NUM_HEADS = 4
HEAD_DIM = H // NUM_HEADS
BOX_DIM = 4
AUG = 64         # self.aug_size
FF = 4 * H       # ff_size = hidden_size * 4
LN_EPS = 1e-6
BLANK_BOX_VAL = 2.0   # self.blank_box = [2,2,2,2]
NEG_INF = -1e9
BL = B * L                 # 16  (batch folded into sublanes)
NHBL = NUM_HEADS * BL      # 64  (heads folded into sublanes for attention)
ACT_W = 128                # lane width of the packed activation slab

# weight-slab column layout (every start is 128-lane aligned -> zero-cost views)
_C_FF1 = 0       # w_ff1        [H, FF]     rows 0:H
_C_QKV = 128     # w_q|w_k|w_v  [H, 3H]     rows 0:H   (scale folded into q)
_C_O = 256       # w_o          [H, H]      rows 0:H
_C_COMB = 384    # W_comb_full  [128, H]    rows 0:128 (ctx | box-fused | zeros)
_C_FF2 = 512     # w_ff2        [FF, H]     rows 0:FF
_W_COLS = 640

# bias-slab row layout (each row padded to 128 lanes)
(R_BCOMB, R_GLN1, R_BLN1, R_BQKV, R_BO, R_GLN2, R_BLN2,
 R_BFF1, R_BFF2, R_GLN3, R_BLN3) = range(11)
_BIAS_ROWS = 16


# ------------------------------- kernel -------------------------------------
def refine_encoder_kernel(act_ref, attn_ref, w_ref, b_ref, out_ref):
    """act_ref  [BL, 128]  : ctx @ lanes 0:H, blanked box @ lanes H:H+BOX_DIM
       attn_ref [128, 64]  : rows 0:64 additive mask bias, rows 64:128 xy_pdf
       w_ref    [128, 640] : packed weight slab (see _C_* layout)
       b_ref    [16, 128]  : packed bias / LN-param slab (see R_* layout)
       out_ref  [BL, H]."""
    f32 = jnp.float32

    def brow(r, width):
        # static row/lane slice of the packed bias slab -> [1, width]
        return b_ref[r:r + 1, 0:width]

    def ln(x, r_gamma, r_beta):
        mu = jnp.mean(x, axis=-1, keepdims=True)
        var = jnp.mean((x - mu) ** 2, axis=-1, keepdims=True)
        return (x - mu) * jax.lax.rsqrt(var + LN_EPS) * brow(r_gamma, H) + brow(r_beta, H)

    act = act_ref[...]                                              # [BL, 128]

    # ---- combine context with box (box-embedding collapsed at pack time) ----
    h = (jnp.dot(act, w_ref[:, _C_COMB:_C_COMB + H], preferred_element_type=f32)
         + brow(R_BCOMB, H))                                        # [BL, H]

    # ---- pre-LN multi-head self-attention (heads folded to sublanes) --------
    xn = ln(h, R_GLN1, R_BLN1)
    qkv = (jnp.dot(xn, w_ref[0:H, _C_QKV:_C_QKV + 3 * H], preferred_element_type=f32)
           + brow(R_BQKV, 3 * H))                                   # [BL, 3H]

    qkvh = pltpu.einshape("lgd->gld", qkv.reshape(BL, 3 * NUM_HEADS, HEAD_DIM))  # [12,BL,HD]
    qh = qkvh[0:NUM_HEADS].reshape(NHBL, HEAD_DIM)                  # [64, 8]
    kh = qkvh[NUM_HEADS:2 * NUM_HEADS].reshape(NHBL, HEAD_DIM)      # [64, 8]
    vh = qkvh[2 * NUM_HEADS:3 * NUM_HEADS].reshape(NHBL, HEAD_DIM)  # [64, 8]

    # one score matmul; off-(head,batch)-block entries killed by the -1e9 bias
    # (1/sqrt(HEAD_DIM) already folded into w_q / b_q)
    s = jnp.einsum("qd,kd->qk", qh, kh, preferred_element_type=f32)  # [64, 64]
    s = s + attn_ref[0:NHBL, :]
    s = s - jnp.max(s, axis=-1, keepdims=True)
    p = jnp.exp(s)                                  # masked entries underflow to 0
    p = p * pl.reciprocal(jnp.sum(p, axis=-1, keepdims=True), approx=True)
    # TODO(synk): xy_pdf_score applied multiplicatively post-softmax without
    # renormalisation, matching the reconstructed TransformerRefineLayer.
    p = p * attn_ref[NHBL:2 * NHBL, :]

    o = jnp.dot(p, vh, preferred_element_type=f32)                   # [64, 8]
    att = pltpu.einshape("hld->lhd", o.reshape(NUM_HEADS, BL, HEAD_DIM)).reshape(BL, H)
    att = (jnp.dot(att, w_ref[0:H, _C_O:_C_O + H], preferred_element_type=f32)
           + brow(R_BO, H))
    h2 = att + h                                                     # residual

    # ---- pre-LN position-wise feed-forward -----------------------------------
    x2 = ln(h2, R_GLN2, R_BLN2)
    ff = (jnp.dot(x2, w_ref[0:H, _C_FF1:_C_FF1 + FF], preferred_element_type=f32)
          + brow(R_BFF1, FF))
    ff = jnp.maximum(ff, 0.0)
    ff = (jnp.dot(ff, w_ref[:, _C_FF2:_C_FF2 + H], preferred_element_type=f32)
          + brow(R_BFF2, H))
    h3 = ff + h2

    # ---- outer self.layer_norm ------------------------------------------------
    out_ref[...] = ln(h3, R_GLN3, R_BLN3)


# --------------------------- parameters -------------------------------------
def make_params(key):
    def dense(k, shape, scale=0.05):
        return jax.random.normal(k, shape, jnp.float32) * scale

    ks = jax.random.split(key, 16)
    return {
        "w_box": dense(ks[0], (BOX_DIM, AUG)),
        "b_box": jnp.zeros((1, AUG), jnp.float32),
        "w_comb": dense(ks[1], (H + AUG, H)),
        "b_comb": jnp.zeros((1, H), jnp.float32),
        "g_ln1": jnp.ones((1, H), jnp.float32),
        "b_ln1": jnp.zeros((1, H), jnp.float32),
        "w_q": dense(ks[2], (H, H)), "b_q": jnp.zeros((1, H), jnp.float32),
        "w_k": dense(ks[3], (H, H)), "b_k": jnp.zeros((1, H), jnp.float32),
        "w_v": dense(ks[4], (H, H)), "b_v": jnp.zeros((1, H), jnp.float32),
        "w_o": dense(ks[5], (H, H)), "b_o": jnp.zeros((1, H), jnp.float32),
        "g_ln2": jnp.ones((1, H), jnp.float32),
        "b_ln2": jnp.zeros((1, H), jnp.float32),
        "w_ff1": dense(ks[6], (H, FF)), "b_ff1": jnp.zeros((1, FF), jnp.float32),
        "w_ff2": dense(ks[7], (FF, H)), "b_ff2": jnp.zeros((1, H), jnp.float32),
        "g_ln3": jnp.ones((1, H), jnp.float32),
        "b_ln3": jnp.zeros((1, H), jnp.float32),
    }


def pack_params(params):
    """Run ONCE at init (hoisted out of the per-call jitted path).

    Returns the [128, 640] weight slab and [16, 128] bias slab.
    Box-embedding linear is collapsed into the combine weight (eval mode only),
    and the 1/sqrt(HEAD_DIM) attention scale is folded into w_q / b_q."""
    f32 = jnp.float32
    scale = 1.0 / (HEAD_DIM ** 0.5)

    w_comb = params["w_comb"].astype(f32)                 # [(H+AUG), H]
    w_comb_ctx, w_comb_box = w_comb[:H, :], w_comb[H:, :]
    w_box_fused = params["w_box"].astype(f32) @ w_comb_box            # [BOX_DIM, H]
    b_comb_eff = params["b_comb"].astype(f32) + params["b_box"].astype(f32) @ w_comb_box

    w_comb_full = jnp.zeros((ACT_W, H), f32)
    w_comb_full = w_comb_full.at[0:H, :].set(w_comb_ctx)
    w_comb_full = w_comb_full.at[H:H + BOX_DIM, :].set(w_box_fused)

    w_qkv = jnp.concatenate([params["w_q"] * scale, params["w_k"], params["w_v"]],
                            axis=1).astype(f32)                       # [H, 3H]
    b_qkv = jnp.concatenate([params["b_q"] * scale, params["b_k"], params["b_v"]],
                            axis=-1).astype(f32)                      # [1, 3H]

    w_all = jnp.zeros((ACT_W, _W_COLS), f32)
    w_all = w_all.at[0:H, _C_FF1:_C_FF1 + FF].set(params["w_ff1"].astype(f32))
    w_all = w_all.at[0:H, _C_QKV:_C_QKV + 3 * H].set(w_qkv)
    w_all = w_all.at[0:H, _C_O:_C_O + H].set(params["w_o"].astype(f32))
    w_all = w_all.at[:, _C_COMB:_C_COMB + H].set(w_comb_full)
    w_all = w_all.at[:, _C_FF2:_C_FF2 + H].set(params["w_ff2"].astype(f32))

    def row(v):
        v = jnp.asarray(v, f32).reshape(-1)
        return jnp.pad(v, (0, 128 - v.shape[0]))

    rows = [b_comb_eff,
            params["g_ln1"], params["b_ln1"],
            b_qkv, params["b_o"],
            params["g_ln2"], params["b_ln2"],
            params["b_ff1"], params["b_ff2"],
            params["g_ln3"], params["b_ln3"]]
    b_all = jnp.stack([row(r) for r in rows]
                      + [jnp.zeros((128,), f32)] * (_BIAS_ROWS - len(rows)))

    return jax.device_put(w_all), jax.device_put(b_all)


# ------------------------------- wrapper ------------------------------------
@jax.jit
def refine_encoder(context, input_box, mask, xy_pdf_score, w_all, b_all):
    """context [B,L,H] f32, input_box [B,L,BOX_DIM] f32, mask [B,1,L] bool,
    xy_pdf_score [B,L,L] f32, packed weight/bias slabs  ->  [B,L,H] f32."""
    f32 = jnp.float32

    # box[:, :, :box_dim][~mask] = blank_box  (done in the wrapper)
    mask_q = mask[:, 0, :, None]                                     # [B, L, 1]
    box = jnp.where(mask_q, input_box, jnp.float32(BLANK_BOX_VAL))

    ctx2d = context.reshape(BL, H).astype(f32)
    box2d = box.reshape(BL, BOX_DIM).astype(f32)
    act = jnp.pad(jnp.concatenate([ctx2d, box2d], axis=1),
                  ((0, 0), (0, ACT_W - H - BOX_DIM)))                # [BL, 128]

    # Head+batch block-diagonal additive key-mask bias and xy_pdf for the
    # fused [NH*BL, NH*BL] attention (keeps folded heads/batches independent).
    kmask = mask[:, 0, :]                                            # [B, L] bool
    same_batch = jnp.eye(B, dtype=bool)[:, None, :, None]            # [B,1,B,1]
    allow = jnp.logical_and(same_batch, kmask[None, None, :, :])     # [B,1,B,L]
    allow = jnp.broadcast_to(allow, (B, L, B, L)).reshape(BL, BL)
    pdf_bl = jnp.where(same_batch, xy_pdf_score[:, :, None, :].astype(f32),
                       0.0).reshape(BL, BL)

    head_eye = jnp.eye(NUM_HEADS, dtype=bool)
    allow64 = jnp.logical_and(head_eye[:, None, :, None],
                              allow[None, :, None, :]).reshape(NHBL, NHBL)
    bias64 = jnp.where(allow64, 0.0, NEG_INF).astype(f32)            # [64, 64]
    pdf64 = (head_eye[:, None, :, None].astype(f32)
             * pdf_bl[None, :, None, :]).reshape(NHBL, NHBL)         # [64, 64]
    attn_slab = jnp.concatenate([bias64, pdf64], axis=0)             # [128, 64]

    vmem = pl.BlockSpec(memory_space=pltpu.MemorySpace.VMEM)
    out2d = pl.pallas_call(
        refine_encoder_kernel,
        out_shape=jax.ShapeDtypeStruct((BL, H), f32),
        in_specs=[vmem] * 4,
        out_specs=vmem,
    )(act, attn_slab, w_all, b_all)

    return out2d.reshape(B, L, H)


if __name__ == "__main__":
    key = jax.random.PRNGKey(0)
    k_ctx, k_box, k_pdf, k_params = jax.random.split(key, 4)

    context = jax.random.normal(k_ctx, (B, L, H), jnp.float32)
    input_box = jax.random.uniform(k_box, (B, L, BOX_DIM), jnp.float32)
    # mask: True = valid; mark the last two positions of every sequence invalid
    mask = jnp.ones((B, 1, L), dtype=bool).at[:, :, -2:].set(False)
    xy_pdf_score = jax.nn.softmax(
        jax.random.normal(k_pdf, (B, L, L), jnp.float32), axis=-1)

    params = make_params(k_params)
    w_all, b_all = pack_params(params)       # hoisted: packing runs once at init

    out = refine_encoder(context, input_box, mask, xy_pdf_score, w_all, b_all)
    out = jax.block_until_ready(out)
    assert out.shape == (B, L, H) and out.dtype == jnp.float32
    assert bool(jnp.all(jnp.isfinite(out)))
    print("KERNEL_OK")
</pallas_src>

<mosaic_0001>
module attributes {stable_mosaic.version = 11 : i64} {
  func.func @refine_encoder_kernel(%arg0: memref<16x128xf32, #tpu.memory_space<vmem>>, %arg1: memref<128x64xf32, #tpu.memory_space<vmem>>, %arg2: memref<128x640xf32, #tpu.memory_space<vmem>>, %arg3: memref<16x128xf32, #tpu.memory_space<vmem>>, %arg4: memref<16x32xf32, #tpu.memory_space<vmem>>) attributes {dimension_semantics = [], scalar_prefetch = 0 : i64, scratch_operands = 0 : i64, tpu.core_type = #tpu.core_type<tc>} {
    %c0 = arith.constant 0 : index
    %c0_0 = arith.constant 0 : index
    %0 = vector.load %arg0[%c0, %c0_0] : memref<16x128xf32, #tpu.memory_space<vmem>>, vector<16x128xf32>
    %c0_1 = arith.constant 0 : index
    %c384 = arith.constant 384 : index
    %1 = vector.load %arg2[%c0_1, %c384] : memref<128x640xf32, #tpu.memory_space<vmem>>, vector<128x32xf32>
    %cst = arith.constant dense<0.000000e+00> : vector<16x32xf32>
    %2 = tpu.matmul %0, %1, %cst {dimension_numbers = #tpu.dot_dimension_numbers<[1], [0], [0], [1], [0, 0, 1, 1], [], []>} : vector<16x128xf32>, vector<128x32xf32>, vector<16x32xf32> -> vector<16x32xf32>
    %c0_2 = arith.constant 0 : index
    %c0_3 = arith.constant 0 : index
    %3 = vector.load %arg3[%c0_2, %c0_3] : memref<16x128xf32, #tpu.memory_space<vmem>>, vector<1x32xf32>
    %4 = vector.broadcast %3 : vector<1x32xf32> to vector<16x32xf32>
    %5 = arith.addf %2, %4 : vector<16x32xf32>
    %cst_4 = arith.constant dense<0.000000e+00> : vector<16xf32>
    %6 = vector.multi_reduction <add>, %5, %cst_4 [1] : vector<16x32xf32> to vector<16xf32>
    %7 = vector.shape_cast %6 : vector<16xf32> to vector<16x1xf32>
    %cst_5 = arith.constant 3.200000e+01 : f32
    %8 = vector.broadcast %cst_5 : f32 to vector<16x1xf32>
    %9 = arith.divf %7, %8 : vector<16x1xf32>
    %10 = vector.broadcast %9 : vector<16x1xf32> to vector<16x32xf32>
    %11 = arith.subf %5, %10 : vector<16x32xf32>
    %12 = arith.mulf %11, %11 : vector<16x32xf32>
    %cst_6 = arith.constant dense<0.000000e+00> : vector<16xf32>
    %13 = vector.multi_reduction <add>, %12, %cst_6 [1] : vector<16x32xf32> to vector<16xf32>
    %14 = vector.shape_cast %13 : vector<16xf32> to vector<16x1xf32>
    %cst_7 = arith.constant 3.200000e+01 : f32
    %15 = vector.broadcast %cst_7 : f32 to vector<16x1xf32>
    %16 = arith.divf %14, %15 : vector<16x1xf32>
    %17 = vector.broadcast %9 : vector<16x1xf32> to vector<16x32xf32>
    %18 = arith.subf %5, %17 : vector<16x32xf32>
    %cst_8 = arith.constant 9.99999997E-7 : f32
    %19 = vector.broadcast %cst_8 : f32 to vector<16x1xf32>
    %20 = arith.addf %16, %19 : vector<16x1xf32>
    %21 = math.rsqrt %20 : vector<16x1xf32>
    %22 = vector.broadcast %21 : vector<16x1xf32> to vector<16x32xf32>
    %23 = arith.mulf %18, %22 : vector<16x32xf32>
    %c1 = arith.constant 1 : index
    %c0_9 = arith.constant 0 : index
    %24 = vector.load %arg3[%c1, %c0_9] : memref<16x128xf32, #tpu.memory_space<vmem>>, vector<1x32xf32>
    %25 = vector.broadcast %24 : vector<1x32xf32> to vector<16x32xf32>
    %26 = arith.mulf %23, %25 : vector<16x32xf32>
    %c2 = arith.constant 2 : index
    %c0_10 = arith.constant 0 : index
    %27 = vector.load %arg3[%c2, %c0_10] : memref<16x128xf32, #tpu.memory_space<vmem>>, vector<1x32xf32>
    %28 = vector.broadcast %27 : vector<1x32xf32> to vector<16x32xf32>
    %29 = arith.addf %26, %28 : vector<16x32xf32>
    %c0_11 = arith.constant 0 : index
    %c128 = arith.constant 128 : index
    %30 = vector.load %arg2[%c0_11, %c128] : memref<128x640xf32, #tpu.memory_space<vmem>>, vector<32x96xf32>
    %cst_12 = arith.constant dense<0.000000e+00> : vector<16x96xf32>
    %31 = tpu.matmul %29, %30, %cst_12 {dimension_numbers = #tpu.dot_dimension_numbers<[1], [0], [0], [1], [0, 0, 1, 1], [], []>} : vector<16x32xf32>, vector<32x96xf32>, vector<16x96xf32> -> vector<16x96xf32>
    %c3 = arith.constant 3 : index
    %c0_13 = arith.constant 0 : index
    %32 = vector.load %arg3[%c3, %c0_13] : memref<16x128xf32, #tpu.memory_space<vmem>>, vector<1x96xf32>
    %33 = vector.broadcast %32 : vector<1x96xf32> to vector<16x96xf32>
    %34 = arith.addf %31, %33 : vector<16x96xf32>
    %35 = vector.shape_cast %34 : vector<16x96xf32> to vector<16x12x8xf32>
    %36 = tpu.transpose %35, [1, 0, 2] : vector<16x12x8xf32> -> vector<12x16x8xf32>
    %37 = vector.extract_strided_slice %36 {offsets = [0, 0, 0], sizes = [4, 16, 8], strides = [1, 1, 1]} : vector<12x16x8xf32> to vector<4x16x8xf32>
    %38 = vector.shape_cast %37 : vector<4x16x8xf32> to vector<64x8xf32>
    %39 = vector.extract_strided_slice %36 {offsets = [4, 0, 0], sizes = [4, 16, 8], strides = [1, 1, 1]} : vector<12x16x8xf32> to vector<4x16x8xf32>
    %40 = vector.shape_cast %39 : vector<4x16x8xf32> to vector<64x8xf32>
    %41 = vector.extract_strided_slice %36 {offsets = [8, 0, 0], sizes = [4, 16, 8], strides = [1, 1, 1]} : vector<12x16x8xf32> to vector<4x16x8xf32>
    %42 = vector.shape_cast %41 : vector<4x16x8xf32> to vector<64x8xf32>
    "tpu.trace_start"() <{level = 10 : i32, message = "qd,kd->qk"}> : () -> ()
    %cst_14 = arith.constant dense<0.000000e+00> : vector<64x64xf32>
    %43 = tpu.matmul %38, %40, %cst_14 {dimension_numbers = #tpu.dot_dimension_numbers<[1], [1], [0], [0], [0, 0, 1, 0], [], []>} : vector<64x8xf32>, vector<64x8xf32>, vector<64x64xf32> -> vector<64x64xf32>
    "tpu.trace_stop"() : () -> ()
    %c0_15 = arith.constant 0 : index
    %c0_16 = arith.constant 0 : index
    %44 = vector.load %arg1[%c0_15, %c0_16] : memref<128x64xf32, #tpu.memory_space<vmem>>, vector<64x64xf32>
    %45 = arith.addf %43, %44 : vector<64x64xf32>
    %cst_17 = arith.constant dense<0xFF800000> : vector<64xf32>
    %46 = vector.multi_reduction <maximumf>, %45, %cst_17 [1] : vector<64x64xf32> to vector<64xf32>
    %47 = vector.shape_cast %46 : vector<64xf32> to vector<64x1xf32>
    %48 = vector.broadcast %47 : vector<64x1xf32> to vector<64x64xf32>
    %49 = arith.subf %45, %48 : vector<64x64xf32>
    %50 = math.exp %49 : vector<64x64xf32>
    %cst_18 = arith.constant dense<0.000000e+00> : vector<64xf32>
    %51 = vector.multi_reduction <add>, %50, %cst_18 [1] : vector<64x64xf32> to vector<64xf32>
    %52 = vector.shape_cast %51 : vector<64xf32> to vector<64x1xf32>
    %53 = tpu.reciprocal %52 {approx = true} : vector<64x1xf32> -> vector<64x1xf32>
    %54 = vector.broadcast %53 : vector<64x1xf32> to vector<64x64xf32>
    %55 = arith.mulf %50, %54 : vector<64x64xf32>
    %c64 = arith.constant 64 : index
    %c0_19 = arith.constant 0 : index
    %56 = vector.load %arg1[%c64, %c0_19] : memref<128x64xf32, #tpu.memory_space<vmem>>, vector<64x64xf32>
    %57 = arith.mulf %55, %56 : vector<64x64xf32>
    %cst_20 = arith.constant dense<0.000000e+00> : vector<64x8xf32>
    %58 = tpu.matmul %57, %42, %cst_20 {dimension_numbers = #tpu.dot_dimension_numbers<[1], [0], [0], [1], [0, 0, 1, 1], [], []>} : vector<64x64xf32>, vector<64x8xf32>, vector<64x8xf32> -> vector<64x8xf32>
    %59 = vector.shape_cast %58 : vector<64x8xf32> to vector<4x16x8xf32>
    %60 = tpu.transpose %59, [1, 0, 2] : vector<4x16x8xf32> -> vector<16x4x8xf32>
    %61 = vector.shape_cast %60 : vector<16x4x8xf32> to vector<16x32xf32>
    %c0_21 = arith.constant 0 : index
    %c256 = arith.constant 256 : index
    %62 = vector.load %arg2[%c0_21, %c256] : memref<128x640xf32, #tpu.memory_space<vmem>>, vector<32x32xf32>
    %cst_22 = arith.constant dense<0.000000e+00> : vector<16x32xf32>
    %63 = tpu.matmul %61, %62, %cst_22 {dimension_numbers = #tpu.dot_dimension_numbers<[1], [0], [0], [1], [0, 0, 1, 1], [], []>} : vector<16x32xf32>, vector<32x32xf32>, vector<16x32xf32> -> vector<16x32xf32>
    %c4 = arith.constant 4 : index
    %c0_23 = arith.constant 0 : index
    %64 = vector.load %arg3[%c4, %c0_23] : memref<16x128xf32, #tpu.memory_space<vmem>>, vector<1x32xf32>
    %65 = vector.broadcast %64 : vector<1x32xf32> to vector<16x32xf32>
    %66 = arith.addf %63, %65 : vector<16x32xf32>
    %67 = arith.addf %66, %5 : vector<16x32xf32>
    %cst_24 = arith.constant dense<0.000000e+00> : vector<16xf32>
    %68 = vector.multi_reduction <add>, %67, %cst_24 [1] : vector<16x32xf32> to vector<16xf32>
    %69 = vector.shape_cast %68 : vector<16xf32> to vector<16x1xf32>
    %cst_25 = arith.constant 3.200000e+01 : f32
    %70 = vector.broadcast %cst_25 : f32 to vector<16x1xf32>
    %71 = arith.divf %69, %70 : vector<16x1xf32>
    %72 = vector.broadcast %71 : vector<16x1xf32> to vector<16x32xf32>
    %73 = arith.subf %67, %72 : vector<16x32xf32>
    %74 = arith.mulf %73, %73 : vector<16x32xf32>
    %cst_26 = arith.constant dense<0.000000e+00> : vector<16xf32>
    %75 = vector.multi_reduction <add>, %74, %cst_26 [1] : vector<16x32xf32> to vector<16xf32>
    %76 = vector.shape_cast %75 : vector<16xf32> to vector<16x1xf32>
    %cst_27 = arith.constant 3.200000e+01 : f32
    %77 = vector.broadcast %cst_27 : f32 to vector<16x1xf32>
    %78 = arith.divf %76, %77 : vector<16x1xf32>
    %79 = vector.broadcast %71 : vector<16x1xf32> to vector<16x32xf32>
    %80 = arith.subf %67, %79 : vector<16x32xf32>
    %cst_28 = arith.constant 9.99999997E-7 : f32
    %81 = vector.broadcast %cst_28 : f32 to vector<16x1xf32>
    %82 = arith.addf %78, %81 : vector<16x1xf32>
    %83 = math.rsqrt %82 : vector<16x1xf32>
    %84 = vector.broadcast %83 : vector<16x1xf32> to vector<16x32xf32>
    %85 = arith.mulf %80, %84 : vector<16x32xf32>
    %c5 = arith.constant 5 : index
    %c0_29 = arith.constant 0 : index
    %86 = vector.load %arg3[%c5, %c0_29] : memref<16x128xf32, #tpu.memory_space<vmem>>, vector<1x32xf32>
    %87 = vector.broadcast %86 : vector<1x32xf32> to vector<16x32xf32>
    %88 = arith.mulf %85, %87 : vector<16x32xf32>
    %c6 = arith.constant 6 : index
    %c0_30 = arith.constant 0 : index
    %89 = vector.load %arg3[%c6, %c0_30] : memref<16x128xf32, #tpu.memory_space<vmem>>, vector<1x32xf32>
    %90 = vector.broadcast %89 : vector<1x32xf32> to vector<16x32xf32>
    %91 = arith.addf %88, %90 : vector<16x32xf32>
    %c0_31 = arith.constant 0 : index
    %c0_32 = arith.constant 0 : index
    %92 = vector.load %arg2[%c0_31, %c0_32] : memref<128x640xf32, #tpu.memory_space<vmem>>, vector<32x128xf32>
    %cst_33 = arith.constant dense<0.000000e+00> : vector<16x128xf32>
    %93 = tpu.matmul %91, %92, %cst_33 {dimension_numbers = #tpu.dot_dimension_numbers<[1], [0], [0], [1], [0, 0, 1, 1], [], []>} : vector<16x32xf32>, vector<32x128xf32>, vector<16x128xf32> -> vector<16x128xf32>
    %c7 = arith.constant 7 : index
    %c0_34 = arith.constant 0 : index
    %94 = vector.load %arg3[%c7, %c0_34] : memref<16x128xf32, #tpu.memory_space<vmem>>, vector<1x128xf32>
    %95 = vector.broadcast %94 : vector<1x128xf32> to vector<16x128xf32>
    %96 = arith.addf %93, %95 : vector<16x128xf32>
    %cst_35 = arith.constant 0.000000e+00 : f32
    %97 = vector.broadcast %cst_35 : f32 to vector<16x128xf32>
    %98 = arith.maximumf %96, %97 : vector<16x128xf32>
    %c0_36 = arith.constant 0 : index
    %c512 = arith.constant 512 : index
    %99 = vector.load %arg2[%c0_36, %c512] : memref<128x640xf32, #tpu.memory_space<vmem>>, vector<128x32xf32>
    %cst_37 = arith.constant dense<0.000000e+00> : vector<16x32xf32>
    %100 = tpu.matmul %98, %99, %cst_37 {dimension_numbers = #tpu.dot_dimension_numbers<[1], [0], [0], [1], [0, 0, 1, 1], [], []>} : vector<16x128xf32>, vector<128x32xf32>, vector<16x32xf32> -> vector<16x32xf32>
    %c8 = arith.constant 8 : index
    %c0_38 = arith.constant 0 : index
    %101 = vector.load %arg3[%c8, %c0_38] : memref<16x128xf32, #tpu.memory_space<vmem>>, vector<1x32xf32>
    %102 = vector.broadcast %101 : vector<1x32xf32> to vector<16x32xf32>
    %103 = arith.addf %100, %102 : vector<16x32xf32>
    %104 = arith.addf %103, %67 : vector<16x32xf32>
    %cst_39 = arith.constant dense<0.000000e+00> : vector<16xf32>
    %105 = vector.multi_reduction <add>, %104, %cst_39 [1] : vector<16x32xf32> to vector<16xf32>
    %106 = vector.shape_cast %105 : vector<16xf32> to vector<16x1xf32>
    %cst_40 = arith.constant 3.200000e+01 : f32
    %107 = vector.broadcast %cst_40 : f32 to vector<16x1xf32>
    %108 = arith.divf %106, %107 : vector<16x1xf32>
    %109 = vector.broadcast %108 : vector<16x1xf32> to vector<16x32xf32>
    %110 = arith.subf %104, %109 : vector<16x32xf32>
    %111 = arith.mulf %110, %110 : vector<16x32xf32>
    %cst_41 = arith.constant dense<0.000000e+00> : vector<16xf32>
    %112 = vector.multi_reduction <add>, %111, %cst_41 [1] : vector<16x32xf32> to vector<16xf32>
    %113 = vector.shape_cast %112 : vector<16xf32> to vector<16x1xf32>
    %cst_42 = arith.constant 3.200000e+01 : f32
    %114 = vector.broadcast %cst_42 : f32 to vector<16x1xf32>
    %115 = arith.divf %113, %114 : vector<16x1xf32>
    %116 = vector.broadcast %108 : vector<16x1xf32> to vector<16x32xf32>
    %117 = arith.subf %104, %116 : vector<16x32xf32>
    %cst_43 = arith.constant 9.99999997E-7 : f32
    %118 = vector.broadcast %cst_43 : f32 to vector<16x1xf32>
    %119 = arith.addf %115, %118 : vector<16x1xf32>
    %120 = math.rsqrt %119 : vector<16x1xf32>
    %121 = vector.broadcast %120 : vector<16x1xf32> to vector<16x32xf32>
    %122 = arith.mulf %117, %121 : vector<16x32xf32>
    %c9 = arith.constant 9 : index
    %c0_44 = arith.constant 0 : index
    %123 = vector.load %arg3[%c9, %c0_44] : memref<16x128xf32, #tpu.memory_space<vmem>>, vector<1x32xf32>
    %124 = vector.broadcast %123 : vector<1x32xf32> to vector<16x32xf32>
    %125 = arith.mulf %122, %124 : vector<16x32xf32>
    %c10 = arith.constant 10 : index
    %c0_45 = arith.constant 0 : index
    %126 = vector.load %arg3[%c10, %c0_45] : memref<16x128xf32, #tpu.memory_space<vmem>>, vector<1x32xf32>
    %127 = vector.broadcast %126 : vector<1x32xf32> to vector<16x32xf32>
    %128 = arith.addf %125, %127 : vector<16x32xf32>
    %c0_46 = arith.constant 0 : index
    %c0_47 = arith.constant 0 : index
    %129 = vector.load %arg4[%c0_46, %c0_47] : memref<16x32xf32, #tpu.memory_space<vmem>>, vector<16x32xf32>
    tpu.vector_store %arg4[%c0_46, %c0_47], %128 {strides = array<i32>} : memref<16x32xf32, #tpu.memory_space<vmem>>, vector<16x32xf32>,
    return
  }
}

</mosaic_0001>

<llo_original>
// kernel: refine_encoder.1
$region0: #{refine_encoder.1}
  #allocation0 [shape = 'u32[]', space=smem, size = 0x4, offset = 0x4, fixed_abs, tag = 'smem constant byte address 0x4 - core index']
  #allocation1 [shape = 'u32[144,128]{1,0:T(1,128)}', space=vmem, size = 0x12000, scoped, tag = 'internal scratch']
  %s0 = inlined_call_operand.vmem [shape: f32[16,128], index: 0, kind: input, shape index: {}]
  %s1 = inlined_call_operand.vmem [shape: f32[128,64], index: 1, kind: input, shape index: {}]
  %s2 = inlined_call_operand.vmem [shape: f32[128,640], index: 2, kind: input, shape index: {}]
  %s3 = inlined_call_operand.vmem [shape: f32[16,128], index: 3, kind: input, shape index: {}]
  %s4 = inlined_call_operand.hbm [shape: f32[16,32], index: 4, kind: output, shape index: {}]
  %s5 = sld [smem:[#allocation0]]
  $region26: #{refine_encoder.1} parent=0
    _
  %s7 = ssub.s32 1, %s5
  %s8 = scalar_select 0, %s7, %s5
  $region1: #{refine_encoder.1} parent=0
    #allocation2 [shape = 'u8[8192]{0}', space=vmem, size = 0x2000, scoped, tag = 'output window, operand 0, single buffered']
    #allocation3 [shape = 's32[1]{0}', space=sflag, size = 0x4, scoped, tag = 'scoped memory for refine_encoder.1']
    %9 = vsyncpa [#allocation3], 0
    // Predicated region
    $region2: #{refine_encoder.1} parent=1 // pred_check
      _
    $region3: #{refine_encoder.1} parent=1 // pred_check_branch
      %11 = sbr.rel (0) target = $region5
    $region4: #{refine_encoder.1} parent=1 // pred_region
      _
    $region5: #{refine_encoder.1} parent=1 // pred_fallthru
      _
    // Predicated region
    $region6: #{refine_encoder.1} parent=1 // pred_check
      _
    $region7: #{refine_encoder.1} parent=1 // pred_check_branch
      %13 = sbr.rel (0) target = $region9
    $region8: #{refine_encoder.1} parent=1 // pred_region
      _
    $region9: #{refine_encoder.1} parent=1 // pred_fallthru
      _
    // Predicated region
    $region10: #{refine_encoder.1} parent=1 // pred_check
      _
    $region11: #{refine_encoder.1} parent=1 // pred_check_branch
      %15 = sbr.rel (0) target = $region13
    $region12: #{refine_encoder.1} parent=1 // pred_region
      _
    $region13: #{refine_encoder.1} parent=1 // pred_fallthru
      _
    // Predicated region
    $region14: #{refine_encoder.1} parent=1 // pred_check
      _
    $region15: #{refine_encoder.1} parent=1 // pred_check_branch
      %17 = sbr.rel (0) target = $region17
    $region16: #{refine_encoder.1} parent=1 // pred_region
      _
    $region17: #{refine_encoder.1} parent=1 // pred_fallthru
      _
    %v18 = vld [vmem:[%s0] sm:$0xff]
    %v19 = vld [vmem:[%s0 + $0x8] sm:$0xff]
    %v20 = vld [vmem:[%s2 + $0x18] sm:$0xff]
    %v21 = vld [vmem:[%s2 + $0x40] sm:$0xff]
    %v22 = vld [vmem:[%s2 + $0x68] sm:$0xff]
    %v23 = vld [vmem:[%s2 + $0x90] sm:$0xff]
    %v24 = vld [vmem:[%s2 + $0xb8] sm:$0xff]
    %v25 = vld [vmem:[%s2 + $0xe0] sm:$0xff]
    %v26 = vld [vmem:[%s2 + $0x108] sm:$0xff]
    %v27 = vld [vmem:[%s2 + $0x130] sm:$0xff]
    %v28 = vld [vmem:[%s2 + $0x158] sm:$0xff]
    %v29 = vld [vmem:[%s2 + $0x180] sm:$0xff]
    %v30 = vld [vmem:[%s2 + $0x1a8] sm:$0xff]
    %v31 = vld [vmem:[%s2 + $0x1d0] sm:$0xff]
    %v32 = vld [vmem:[%s2 + $0x1f8] sm:$0xff]
    %v33 = vld [vmem:[%s2 + $0x220] sm:$0xff]
    %v34 = vld [vmem:[%s2 + $0x248] sm:$0xff]
    %v35 = vld [vmem:[%s2 + $0x270] sm:$0xff]
    %v36 = vld [vmem:[%s3] sm:$0x1]
    %v37 = vlaneseq
    %v38 = vshrl.u32 %v37, 7
    %v39 = vsub.s32 0, %v38
    %v40 = vrot.slane %v36, %v39
    %41 = vmatprep.subr.mxu0 0.0
    %42 = vmatpush1.msra.mxu0 %v35
    %43 = vmatprep.subr.mxu0 0.0
    %44 = vmatpush1.msra.mxu0 %v34
    %45 = vmatprep.subr.mxu0 0.0
    %46 = vmatpush1.msra.mxu0 %v33
    %47 = vmatprep.subr.mxu0 0.0
    %48 = vmatpush1.msra.mxu0 %v32
    %49 = vmatprep.subr.mxu0 0.0
    %50 = vmatpush1.msra.mxu0 %v31
    %51 = vmatprep.subr.mxu0 0.0
    %52 = vmatpush1.msra.mxu0 %v30
    %53 = vmatprep.subr.mxu0 0.0
    %54 = vmatpush1.msra.mxu0 %v29
    %55 = vmatprep.subr.mxu0 0.0
    %56 = vmatpush1.msra.mxu0 %v28
    %57 = vmatprep.subr.mxu0 0.0
    %58 = vmatpush1.msra.mxu0 %v27
    %59 = vmatprep.subr.mxu0 0.0
    %60 = vmatpush1.msra.mxu0 %v26
    %61 = vmatprep.subr.mxu0 0.0
    %62 = vmatpush1.msra.mxu0 %v25
    %63 = vmatprep.subr.mxu0 0.0
    %64 = vmatpush1.msra.mxu0 %v24
    %65 = vmatprep.subr.mxu0 0.0
    %66 = vmatpush1.msra.mxu0 %v23
    %67 = vmatprep.subr.mxu0 0.0
    %68 = vmatpush1.msra.mxu0 %v22
    %69 = vmatprep.subr.mxu0 0.0
    %70 = vmatpush1.msra.mxu0 %v21
    %71 = vmatprep.subr.mxu0 0.0
    %72 = vmatpush1.msra.mxu0 %v20
    %73 = vmatprep.subr.mxu0 0.0
    %74 = vmatpush2.msra.mxu0 0.0
    %75 = vmatprep.subr.mxu0 0.0
    %76 = vmatpush2.msra.mxu0 0.0
    %77 = vmatprep.subr.mxu0 0.0
    %78 = vmatpush2.msra.mxu0 0.0
    %79 = vmatprep.subr.mxu0 0.0
    %80 = vmatpush2.msra.mxu0 0.0
    %81 = vmatprep.subr.mxu0 0.0
    %82 = vmatpush2.msra.mxu0 0.0
    %83 = vmatprep.subr.mxu0 0.0
    %84 = vmatpush2.msra.mxu0 0.0
    %85 = vmatprep.subr.mxu0 0.0
    %86 = vmatpush2.msra.mxu0 0.0
    %87 = vmatprep.subr.mxu0 0.0
    %88 = vmatpush2.msra.mxu0 0.0
    %89 = vmatprep.subr.mxu0 0.0
    %90 = vmatpush2.msra.mxu0 0.0
    %91 = vmatprep.subr.mxu0 0.0
    %92 = vmatpush2.msra.mxu0 0.0
    %93 = vmatprep.subr.mxu0 0.0
    %94 = vmatpush2.msra.mxu0 0.0
    %95 = vmatprep.subr.mxu0 0.0
    %96 = vmatpush2.msra.mxu0 0.0
    %97 = vmatprep.subr.mxu0 0.0
    %98 = vmatpush2.msra.mxu0 0.0
    %99 = vmatprep.subr.mxu0 0.0
    %100 = vmatpush2.msra.mxu0 0.0
    %101 = vmatprep.subr.mxu0 0.0
    %102 = vmatpush2.msra.mxu0 0.0
    %103 = vmatprep.subr.mxu0 0.0
    %104 = vmatpush2.msra.mxu0 0.0
    %105 = vmatprep.mubr.f32.mxu0 0.0
    %106 = vmatmul.mubr.f32.gmra.mxu0 %v18
    %v107 = vpop.f32.mrf.mxu0
    %v108 = vadd.f32 %v40, %v107
    %v109 = vpop.f32.mrf.mxu0
    %110 = vmatprep.mubr.f32.mxu0 0.0
    %111 = vmatmul.mubr.f32.gmra.mxu0 %v19
    %v112 = vpop.f32.mrf.mxu0
    %v113 = vadd.f32 %v40, %v112
    %v114 = vpop.f32.mrf.mxu0
    %115 = vdwg.mxu0
    %vm116 = vcmask 261120
    %v117 = vsel %vm116, %v108, 0.0
    %118 = vadd.xlane.f32.xlu0 %v117
    %v119 = vpop.xlane.xlu0 %118
    %v120 = vsel %vm116, %v113, 0.0
    %121 = vadd.xlane.f32.xlu0 %v120
    %v122 = vpop.xlane.xlu0 %121
    %v123 = vrcp.pop 32.0
    %v124 = vmul.f32 %v119, %v123
    %v125 = vmul.f32 %v122, %v123
    %v126 = vsub.f32 %v108, %v124
    %v127 = vsub.f32 %v113, %v125
    %v128 = vmul.f32 %v126, %v126
    %v129 = vmul.f32 %v127, %v127
    %v130 = vsel %vm116, %v128, 0.0
    %131 = vadd.xlane.f32.xlu0 %v130
    %v132 = vpop.xlane.xlu0 %131
    %v133 = vsel %vm116, %v129, 0.0
    %134 = vadd.xlane.f32.xlu0 %v133
    %v135 = vpop.xlane.xlu0 %134
    %v136 = vmul.f32 %v132, %v123
    %v137 = vmul.f32 %v135, %v123
    %v138 = vadd.f32 %v136, 1e-06
    %v139 = vadd.f32 %v137, 1e-06
    %v140 = vrsqrt.pop %v138
    %v141 = vrsqrt.pop %v139
    %v142 = vmul.f32 %v126, %v140
    %v143 = vmul.f32 %v127, %v141
    %v144 = vld [vmem:[%s3 + $0x1] sm:$0x1]
    %v145 = vlaneseq
    %v146 = vshrl.u32 %v145, 7
    %v147 = vsub.s32 0, %v146
    %v148 = vrot.slane %v144, %v147
    %v149 = vmul.f32 %v142, %v148
    %v150 = vmul.f32 %v143, %v148
    %v151 = vld [vmem:[%s3 + $0x2] sm:$0x1]
    %v152 = vlaneseq
    %v153 = vshrl.u32 %v152, 7
    %v154 = vsub.s32 0, %v153
    %v155 = vrot.slane %v151, %v154
    %v156 = vadd.f32 %v149, %v155
    %v157 = vadd.f32 %v150, %v155
    %v158 = vld [vmem:[%s2 + $0x8] sm:$0xff]
    %v159 = vld [vmem:[%s2 + $0x30] sm:$0xff]
    %v160 = vld [vmem:[%s2 + $0x58] sm:$0xff]
    %v161 = vld [vmem:[%s2 + $0x80] sm:$0xff]
    %v162 = vld [vmem:[%s3 + $0x3] sm:$0x1]
    %v163 = vlaneseq
    %v164 = vshrl.u32 %v163, 7
    %v165 = vsub.s32 0, %v164
    %v166 = vrot.slane %v162, %v165
    %v168 = vsel %vm116, %v156, 0
    %v171 = vsel %vm116, %v157, 0
    %173 = vmatprep.subr.mxu0 0.0
    %174 = vmatpush1.msra.mxu0 0.0
    %175 = vmatprep.subr.mxu0 0.0
    %176 = vmatpush1.msra.mxu0 0.0
    %177 = vmatprep.subr.mxu0 0.0
    %178 = vmatpush1.msra.mxu0 0.0
    %179 = vmatprep.subr.mxu0 0.0
    %180 = vmatpush1.msra.mxu0 0.0
    %181 = vmatprep.subr.mxu0 0.0
    %182 = vmatpush1.msra.mxu0 0.0
    %183 = vmatprep.subr.mxu0 0.0
    %184 = vmatpush1.msra.mxu0 0.0
    %185 = vmatprep.subr.mxu0 0.0
    %186 = vmatpush1.msra.mxu0 0.0
    %187 = vmatprep.subr.mxu0 0.0
    %188 = vmatpush1.msra.mxu0 0.0
    %189 = vmatprep.subr.mxu0 0.0
    %190 = vmatpush1.msra.mxu0 0.0
    %191 = vmatprep.subr.mxu0 0.0
    %192 = vmatpush1.msra.mxu0 0.0
    %193 = vmatprep.subr.mxu0 0.0
    %194 = vmatpush1.msra.mxu0 0.0
    %195 = vmatprep.subr.mxu0 0.0
    %196 = vmatpush1.msra.mxu0 0.0
    %197 = vmatprep.subr.mxu0 0.0
    %198 = vmatpush1.msra.mxu0 %v161
    %199 = vmatprep.subr.mxu0 0.0
    %200 = vmatpush1.msra.mxu0 %v160
    %201 = vmatprep.subr.mxu0 0.0
    %202 = vmatpush1.msra.mxu0 %v159
    %203 = vmatprep.subr.mxu0 0.0
    %204 = vmatpush1.msra.mxu0 %v158
    %205 = vmatprep.subr.mxu0 0.0
    %206 = vmatpush2.msra.mxu0 0.0
    %207 = vmatprep.subr.mxu0 0.0
    %208 = vmatpush2.msra.mxu0 0.0
    %209 = vmatprep.subr.mxu0 0.0
    %210 = vmatpush2.msra.mxu0 0.0
    %211 = vmatprep.subr.mxu0 0.0
    %212 = vmatpush2.msra.mxu0 0.0
    %213 = vmatprep.subr.mxu0 0.0
    %214 = vmatpush2.msra.mxu0 0.0
    %215 = vmatprep.subr.mxu0 0.0
    %216 = vmatpush2.msra.mxu0 0.0
    %217 = vmatprep.subr.mxu0 0.0
    %218 = vmatpush2.msra.mxu0 0.0
    %219 = vmatprep.subr.mxu0 0.0
    %220 = vmatpush2.msra.mxu0 0.0
    %221 = vmatprep.subr.mxu0 0.0
    %222 = vmatpush2.msra.mxu0 0.0
    %223 = vmatprep.subr.mxu0 0.0
    %224 = vmatpush2.msra.mxu0 0.0
    %225 = vmatprep.subr.mxu0 0.0
    %226 = vmatpush2.msra.mxu0 0.0
    %227 = vmatprep.subr.mxu0 0.0
    %228 = vmatpush2.msra.mxu0 0.0
    %229 = vmatprep.subr.mxu0 0.0
    %230 = vmatpush2.msra.mxu0 0.0
    %231 = vmatprep.subr.mxu0 0.0
    %232 = vmatpush2.msra.mxu0 0.0
    %233 = vmatprep.subr.mxu0 0.0
    %234 = vmatpush2.msra.mxu0 0.0
    %235 = vmatprep.subr.mxu0 0.0
    %236 = vmatpush2.msra.mxu0 0.0
    %237 = vmatprep.mubr.f32.mxu0 0.0
    %238 = vmatmul.mubr.f32.gmra.mxu0 %v168
    %v239 = vpop.f32.mrf.mxu0
    %v240 = vadd.f32 %v166, %v239
    %v241 = vpop.f32.mrf.mxu0
    %242 = vmatprep.mubr.f32.mxu0 0.0
    %243 = vmatmul.mubr.f32.gmra.mxu0 %v171
    %v244 = vpop.f32.mrf.mxu0
    %v245 = vadd.f32 %v166, %v244
    %v246 = vpop.f32.mrf.mxu0
    %247 = vdwg.mxu0
    %250 = vrot.lane.b32.xlu0 %v240, 120
    %v251 = vpop.permute.xlu0 %250
    %252 = vrot.lane.b32.xlu0 %v245, 120
    %v253 = vpop.permute.xlu0 %252
    %256 = vrot.lane.b32.xlu0 %v240, 112
    %v257 = vpop.permute.xlu0 %256
    %258 = vrot.lane.b32.xlu0 %v245, 112
    %v259 = vpop.permute.xlu0 %258
    %262 = vrot.lane.b32.xlu0 %v240, 104
    %v263 = vpop.permute.xlu0 %262
    %264 = vrot.lane.b32.xlu0 %v245, 104
    %v265 = vpop.permute.xlu0 %264
    %268 = vrot.lane.b32.xlu0 %v240, 96
    %v269 = vpop.permute.xlu0 %268
    %270 = vrot.lane.b32.xlu0 %v245, 96
    %v271 = vpop.permute.xlu0 %270
    %274 = vrot.lane.b32.xlu0 %v240, 88
    %v275 = vpop.permute.xlu0 %274
    %276 = vrot.lane.b32.xlu0 %v245, 88
    %v277 = vpop.permute.xlu0 %276
    %280 = vrot.lane.b32.xlu0 %v240, 80
    %v281 = vpop.permute.xlu0 %280
    %282 = vrot.lane.b32.xlu0 %v245, 80
    %v283 = vpop.permute.xlu0 %282
    %286 = vrot.lane.b32.xlu0 %v240, 72
    %v287 = vpop.permute.xlu0 %286
    %288 = vrot.lane.b32.xlu0 %v245, 72
    %v289 = vpop.permute.xlu0 %288
    %292 = vrot.lane.b32.xlu0 %v240, 64
    %v293 = vpop.permute.xlu0 %292
    %294 = vrot.lane.b32.xlu0 %v245, 64
    %v295 = vpop.permute.xlu0 %294
    %298 = vrot.lane.b32.xlu0 %v240, 56
    %v299 = vpop.permute.xlu0 %298
    %300 = vrot.lane.b32.xlu0 %v245, 56
    %v301 = vpop.permute.xlu0 %300
    %304 = vrot.lane.b32.xlu0 %v240, 48
    %v305 = vpop.permute.xlu0 %304
    %306 = vrot.lane.b32.xlu0 %v245, 48
    %v307 = vpop.permute.xlu0 %306
    %310 = vrot.lane.b32.xlu0 %v240, 40
    %v311 = vpop.permute.xlu0 %310
    %312 = vrot.lane.b32.xlu0 %v245, 40
    %v313 = vpop.permute.xlu0 %312
    %v316 = vcombine.low %v240, %v257
    %v317 = vcombine.high %v240, %v257
    %v319 = vunpack.c.l.s4 1983009808
    %v320 = vunpack.c.0.s8 %v319
    %v321 = vlaneseq
    %v322 = vshrl.u32 %v321, 7
    %v323 = vsub.s32 %v320, %v322
    %v324 = vrot.slane %v316, %v323
    %v326 = vunpack.c.l.s4 1983009808
    %v327 = vunpack.c.0.s8 %v326
    %v328 = vlaneseq
    %v329 = vshrl.u32 %v328, 7
    %v330 = vsub.s32 %v327, %v329
    %v331 = vrot.slane %v317, %v330
    %v332 = vcombine.low %v251, %v263
    %v333 = vcombine.high %v251, %v263
    %v335 = vunpack.c.l.s4 1983009808
    %v336 = vunpack.c.0.s8 %v335
    %v337 = vlaneseq
    %v338 = vshrl.u32 %v337, 7
    %v339 = vsub.s32 %v336, %v338
    %v340 = vrot.slane %v332, %v339
    %v342 = vunpack.c.l.s4 1983009808
    %v343 = vunpack.c.0.s8 %v342
    %v344 = vlaneseq
    %v345 = vshrl.u32 %v344, 7
    %v346 = vsub.s32 %v343, %v345
    %v347 = vrot.slane %v333, %v346
    %v348 = vcombine.low %v269, %v281
    %v349 = vcombine.high %v269, %v281
    %v351 = vunpack.c.l.s4 1983009808
    %v352 = vunpack.c.0.s8 %v351
    %v353 = vlaneseq
    %v354 = vshrl.u32 %v353, 7
    %v355 = vsub.s32 %v352, %v354
    %v356 = vrot.slane %v348, %v355
    %v358 = vunpack.c.l.s4 1983009808
    %v359 = vunpack.c.0.s8 %v358
    %v360 = vlaneseq
    %v361 = vshrl.u32 %v360, 7
    %v362 = vsub.s32 %v359, %v361
    %v363 = vrot.slane %v349, %v362
    %v364 = vcombine.low %v275, %v287
    %v365 = vcombine.high %v275, %v287
    %v367 = vunpack.c.l.s4 1983009808
    %v368 = vunpack.c.0.s8 %v367
    %v369 = vlaneseq
    %v370 = vshrl.u32 %v369, 7
    %v371 = vsub.s32 %v368, %v370
    %v372 = vrot.slane %v364, %v371
    %v374 = vunpack.c.l.s4 1983009808
    %v375 = vunpack.c.0.s8 %v374
    %v376 = vlaneseq
    %v377 = vshrl.u32 %v376, 7
    %v378 = vsub.s32 %v375, %v377
    %v379 = vrot.slane %v365, %v378
    %v380 = vcombine.low %v324, %v340
    %v381 = vcombine.high %v324, %v340
    %v383 = vunpack.c.l.s4 1934713408
    %v384 = vunpack.c.0.s8 %v383
    %v385 = vlaneseq
    %v386 = vshrl.u32 %v385, 7
    %v387 = vsub.s32 %v384, %v386
    %v388 = vrot.slane %v380, %v387
    %v390 = vunpack.c.l.s4 1934713408
    %v391 = vunpack.c.0.s8 %v390
    %v392 = vlaneseq
    %v393 = vshrl.u32 %v392, 7
    %v394 = vsub.s32 %v391, %v393
    %v395 = vrot.slane %v381, %v394
    %v396 = vcombine.low %v331, %v347
    %v397 = vcombine.high %v331, %v347
    %v399 = vunpack.c.l.s4 1934713408
    %v400 = vunpack.c.0.s8 %v399
    %v401 = vlaneseq
    %v402 = vshrl.u32 %v401, 7
    %v403 = vsub.s32 %v400, %v402
    %v404 = vrot.slane %v396, %v403
    %v406 = vunpack.c.l.s4 1934713408
    %v407 = vunpack.c.0.s8 %v406
    %v408 = vlaneseq
    %v409 = vshrl.u32 %v408, 7
    %v410 = vsub.s32 %v407, %v409
    %v411 = vrot.slane %v397, %v410
    %v412 = vcombine.low %v356, %v372
    %v413 = vcombine.high %v356, %v372
    %v415 = vunpack.c.l.s4 1934713408
    %v416 = vunpack.c.0.s8 %v415
    %v417 = vlaneseq
    %v418 = vshrl.u32 %v417, 7
    %v419 = vsub.s32 %v416, %v418
    %v420 = vrot.slane %v412, %v419
    %v422 = vunpack.c.l.s4 1934713408
    %v423 = vunpack.c.0.s8 %v422
    %v424 = vlaneseq
    %v425 = vshrl.u32 %v424, 7
    %v426 = vsub.s32 %v423, %v425
    %v427 = vrot.slane %v413, %v426
    %v428 = vcombine.low %v363, %v379
    %v429 = vcombine.high %v363, %v379
    %v431 = vunpack.c.l.s4 1934713408
    %v432 = vunpack.c.0.s8 %v431
    %v433 = vlaneseq
    %v434 = vshrl.u32 %v433, 7
    %v435 = vsub.s32 %v432, %v434
    %v436 = vrot.slane %v428, %v435
    %v438 = vunpack.c.l.s4 1934713408
    %v439 = vunpack.c.0.s8 %v438
    %v440 = vlaneseq
    %v441 = vshrl.u32 %v440, 7
    %v442 = vsub.s32 %v439, %v441
    %v443 = vrot.slane %v429, %v442
    %v444 = vcombine.low %v388, %v420
    %v445 = vcombine.high %v388, %v420
    %v446 = vcombine.low %v395, %v427
    %v447 = vcombine.high %v395, %v427
    %v448 = vcombine.low %v404, %v436
    %v449 = vcombine.high %v404, %v436
    %v450 = vcombine.low %v411, %v443
    %v451 = vcombine.high %v411, %v443
    %v452 = vcombine.low %v293, %v305
    %v453 = vcombine.high %v293, %v305
    %v455 = vunpack.c.l.s4 1983009808
    %v456 = vunpack.c.0.s8 %v455
    %v457 = vlaneseq
    %v458 = vshrl.u32 %v457, 7
    %v459 = vsub.s32 %v456, %v458
    %v460 = vrot.slane %v452, %v459
    %v462 = vunpack.c.l.s4 1983009808
    %v463 = vunpack.c.0.s8 %v462
    %v464 = vlaneseq
    %v465 = vshrl.u32 %v464, 7
    %v466 = vsub.s32 %v463, %v465
    %v467 = vrot.slane %v453, %v466
    %v468 = vcombine.low %v299, %v311
    %v469 = vcombine.high %v299, %v311
    %v471 = vunpack.c.l.s4 1983009808
    %v472 = vunpack.c.0.s8 %v471
    %v473 = vlaneseq
    %v474 = vshrl.u32 %v473, 7
    %v475 = vsub.s32 %v472, %v474
    %v476 = vrot.slane %v468, %v475
    %v478 = vunpack.c.l.s4 1983009808
    %v479 = vunpack.c.0.s8 %v478
    %v480 = vlaneseq
    %v481 = vshrl.u32 %v480, 7
    %v482 = vsub.s32 %v479, %v481
    %v483 = vrot.slane %v469, %v482
    %v484 = vcombine.low %v460, %v476
    %v485 = vcombine.high %v460, %v476
    %v487 = vunpack.c.l.s4 1934713408
    %v488 = vunpack.c.0.s8 %v487
    %v489 = vlaneseq
    %v490 = vshrl.u32 %v489, 7
    %v491 = vsub.s32 %v488, %v490
    %v492 = vrot.slane %v484, %v491
    %v494 = vunpack.c.l.s4 1934713408
    %v495 = vunpack.c.0.s8 %v494
    %v496 = vlaneseq
    %v497 = vshrl.u32 %v496, 7
    %v498 = vsub.s32 %v495, %v497
    %v499 = vrot.slane %v485, %v498
    %v500 = vcombine.low %v467, %v483
    %v501 = vcombine.high %v467, %v483
    %v503 = vunpack.c.l.s4 1934713408
    %v504 = vunpack.c.0.s8 %v503
    %v505 = vlaneseq
    %v506 = vshrl.u32 %v505, 7
    %v507 = vsub.s32 %v504, %v506
    %v508 = vrot.slane %v500, %v507
    %v510 = vunpack.c.l.s4 1934713408
    %v511 = vunpack.c.0.s8 %v510
    %v512 = vlaneseq
    %v513 = vshrl.u32 %v512, 7
    %v514 = vsub.s32 %v511, %v513
    %v515 = vrot.slane %v501, %v514
    %v516 = vcombine.high %v492, 0.0
    %v517 = vcombine.high %v499, 0.0
    %v518 = vcombine.high %v508, 0.0
    %v519 = vcombine.high %v515, 0.0
    %v520 = vcombine.low %v245, %v259
    %v521 = vcombine.high %v245, %v259
    %v523 = vunpack.c.l.s4 1983009808
    %v524 = vunpack.c.0.s8 %v523
    %v525 = vlaneseq
    %v526 = vshrl.u32 %v525, 7
    %v527 = vsub.s32 %v524, %v526
    %v528 = vrot.slane %v520, %v527
    %v530 = vunpack.c.l.s4 1983009808
    %v531 = vunpack.c.0.s8 %v530
    %v532 = vlaneseq
    %v533 = vshrl.u32 %v532, 7
    %v534 = vsub.s32 %v531, %v533
    %v535 = vrot.slane %v521, %v534
    %v536 = vcombine.low %v253, %v265
    %v537 = vcombine.high %v253, %v265
    %v539 = vunpack.c.l.s4 1983009808
    %v540 = vunpack.c.0.s8 %v539
    %v541 = vlaneseq
    %v542 = vshrl.u32 %v541, 7
    %v543 = vsub.s32 %v540, %v542
    %v544 = vrot.slane %v536, %v543
    %v546 = vunpack.c.l.s4 1983009808
    %v547 = vunpack.c.0.s8 %v546
    %v548 = vlaneseq
    %v549 = vshrl.u32 %v548, 7
    %v550 = vsub.s32 %v547, %v549
    %v551 = vrot.slane %v537, %v550
    %v552 = vcombine.low %v271, %v283
    %v553 = vcombine.high %v271, %v283
    %v555 = vunpack.c.l.s4 1983009808
    %v556 = vunpack.c.0.s8 %v555
    %v557 = vlaneseq
    %v558 = vshrl.u32 %v557, 7
    %v559 = vsub.s32 %v556, %v558
    %v560 = vrot.slane %v552, %v559
    %v562 = vunpack.c.l.s4 1983009808
    %v563 = vunpack.c.0.s8 %v562
    %v564 = vlaneseq
    %v565 = vshrl.u32 %v564, 7
    %v566 = vsub.s32 %v563, %v565
    %v567 = vrot.slane %v553, %v566
    %v568 = vcombine.low %v277, %v289
    %v569 = vcombine.high %v277, %v289
    %v571 = vunpack.c.l.s4 1983009808
    %v572 = vunpack.c.0.s8 %v571
    %v573 = vlaneseq
    %v574 = vshrl.u32 %v573, 7
    %v575 = vsub.s32 %v572, %v574
    %v576 = vrot.slane %v568, %v575
    %v578 = vunpack.c.l.s4 1983009808
    %v579 = vunpack.c.0.s8 %v578
    %v580 = vlaneseq
    %v581 = vshrl.u32 %v580, 7
    %v582 = vsub.s32 %v579, %v581
    %v583 = vrot.slane %v569, %v582
    %v584 = vcombine.low %v528, %v544
    %v585 = vcombine.high %v528, %v544
    %v587 = vunpack.c.l.s4 1934713408
    %v588 = vunpack.c.0.s8 %v587
    %v589 = vlaneseq
    %v590 = vshrl.u32 %v589, 7
    %v591 = vsub.s32 %v588, %v590
    %v592 = vrot.slane %v584, %v591
    %v594 = vunpack.c.l.s4 1934713408
    %v595 = vunpack.c.0.s8 %v594
    %v596 = vlaneseq
    %v597 = vshrl.u32 %v596, 7
    %v598 = vsub.s32 %v595, %v597
    %v599 = vrot.slane %v585, %v598
    %v600 = vcombine.low %v535, %v551
    %v601 = vcombine.high %v535, %v551
    %v603 = vunpack.c.l.s4 1934713408
    %v604 = vunpack.c.0.s8 %v603
    %v605 = vlaneseq
    %v606 = vshrl.u32 %v605, 7
    %v607 = vsub.s32 %v604, %v606
    %v608 = vrot.slane %v600, %v607
    %v610 = vunpack.c.l.s4 1934713408
    %v611 = vunpack.c.0.s8 %v610
    %v612 = vlaneseq
    %v613 = vshrl.u32 %v612, 7
    %v614 = vsub.s32 %v611, %v613
    %v615 = vrot.slane %v601, %v614
    %v616 = vcombine.low %v560, %v576
    %v617 = vcombine.high %v560, %v576
    %v619 = vunpack.c.l.s4 1934713408
    %v620 = vunpack.c.0.s8 %v619
    %v621 = vlaneseq
    %v622 = vshrl.u32 %v621, 7
    %v623 = vsub.s32 %v620, %v622
    %v624 = vrot.slane %v616, %v623
    %v626 = vunpack.c.l.s4 1934713408
    %v627 = vunpack.c.0.s8 %v626
    %v628 = vlaneseq
    %v629 = vshrl.u32 %v628, 7
    %v630 = vsub.s32 %v627, %v629
    %v631 = vrot.slane %v617, %v630
    %v632 = vcombine.low %v567, %v583
    %v633 = vcombine.high %v567, %v583
    %v635 = vunpack.c.l.s4 1934713408
    %v636 = vunpack.c.0.s8 %v635
    %v637 = vlaneseq
    %v638 = vshrl.u32 %v637, 7
    %v639 = vsub.s32 %v636, %v638
    %v640 = vrot.slane %v632, %v639
    %v642 = vunpack.c.l.s4 1934713408
    %v643 = vunpack.c.0.s8 %v642
    %v644 = vlaneseq
    %v645 = vshrl.u32 %v644, 7
    %v646 = vsub.s32 %v643, %v645
    %v647 = vrot.slane %v633, %v646
    %v648 = vcombine.low %v592, %v624
    %v649 = vcombine.high %v592, %v624
    %v650 = vcombine.low %v599, %v631
    %v651 = vcombine.high %v599, %v631
    %v652 = vcombine.low %v608, %v640
    %v653 = vcombine.high %v608, %v640
    %v654 = vcombine.low %v615, %v647
    %v655 = vcombine.high %v615, %v647
    %v656 = vcombine.low %v295, %v307
    %v657 = vcombine.high %v295, %v307
    %v659 = vunpack.c.l.s4 1983009808
    %v660 = vunpack.c.0.s8 %v659
    %v661 = vlaneseq
    %v662 = vshrl.u32 %v661, 7
    %v663 = vsub.s32 %v660, %v662
    %v664 = vrot.slane %v656, %v663
    %v666 = vunpack.c.l.s4 1983009808
    %v667 = vunpack.c.0.s8 %v666
    %v668 = vlaneseq
    %v669 = vshrl.u32 %v668, 7
    %v670 = vsub.s32 %v667, %v669
    %v671 = vrot.slane %v657, %v670
    %v672 = vcombine.low %v301, %v313
    %v673 = vcombine.high %v301, %v313
    %v675 = vunpack.c.l.s4 1983009808
    %v676 = vunpack.c.0.s8 %v675
    %v677 = vlaneseq
    %v678 = vshrl.u32 %v677, 7
    %v679 = vsub.s32 %v676, %v678
    %v680 = vrot.slane %v672, %v679
    %v682 = vunpack.c.l.s4 1983009808
    %v683 = vunpack.c.0.s8 %v682
    %v684 = vlaneseq
    %v685 = vshrl.u32 %v684, 7
    %v686 = vsub.s32 %v683, %v685
    %v687 = vrot.slane %v673, %v686
    %v688 = vcombine.low %v664, %v680
    %v689 = vcombine.high %v664, %v680
    %v691 = vunpack.c.l.s4 1934713408
    %v692 = vunpack.c.0.s8 %v691
    %v693 = vlaneseq
    %v694 = vshrl.u32 %v693, 7
    %v695 = vsub.s32 %v692, %v694
    %v696 = vrot.slane %v688, %v695
    %v698 = vunpack.c.l.s4 1934713408
    %v699 = vunpack.c.0.s8 %v698
    %v700 = vlaneseq
    %v701 = vshrl.u32 %v700, 7
    %v702 = vsub.s32 %v699, %v701
    %v703 = vrot.slane %v689, %v702
    %v704 = vcombine.low %v671, %v687
    %v705 = vcombine.high %v671, %v687
    %v707 = vunpack.c.l.s4 1934713408
    %v708 = vunpack.c.0.s8 %v707
    %v709 = vlaneseq
    %v710 = vshrl.u32 %v709, 7
    %v711 = vsub.s32 %v708, %v710
    %v712 = vrot.slane %v704, %v711
    %v714 = vunpack.c.l.s4 1934713408
    %v715 = vunpack.c.0.s8 %v714
    %v716 = vlaneseq
    %v717 = vshrl.u32 %v716, 7
    %v718 = vsub.s32 %v715, %v717
    %v719 = vrot.slane %v705, %v718
    %v720 = vcombine.high %v696, 0.0
    %v721 = vcombine.high %v703, 0.0
    %v722 = vcombine.high %v712, 0.0
    %v723 = vcombine.high %v719, 0.0
    %v724 = vcombine.low %v444, %v446
    %v725 = vcombine.high %v444, %v446
    %v727 = vunpack.c.l.s4 1983009808
    %v728 = vunpack.c.0.s8 %v727
    %v729 = vlaneseq
    %v730 = vshrl.u32 %v729, 7
    %v731 = vsub.s32 %v728, %v730
    %v732 = vrot.slane %v724, %v731
    %v734 = vunpack.c.l.s4 1983009808
    %v735 = vunpack.c.0.s8 %v734
    %v736 = vlaneseq
    %v737 = vshrl.u32 %v736, 7
    %v738 = vsub.s32 %v735, %v737
    %v739 = vrot.slane %v725, %v738
    %v740 = vcombine.low %v445, %v447
    %v741 = vcombine.high %v445, %v447
    %v743 = vunpack.c.l.s4 1983009808
    %v744 = vunpack.c.0.s8 %v743
    %v745 = vlaneseq
    %v746 = vshrl.u32 %v745, 7
    %v747 = vsub.s32 %v744, %v746
    %v748 = vrot.slane %v740, %v747
    %v750 = vunpack.c.l.s4 1983009808
    %v751 = vunpack.c.0.s8 %v750
    %v752 = vlaneseq
    %v753 = vshrl.u32 %v752, 7
    %v754 = vsub.s32 %v751, %v753
    %v755 = vrot.slane %v741, %v754
    %v756 = vcombine.low %v448, %v450
    %v757 = vcombine.high %v448, %v450
    %v759 = vunpack.c.l.s4 1983009808
    %v760 = vunpack.c.0.s8 %v759
    %v761 = vlaneseq
    %v762 = vshrl.u32 %v761, 7
    %v763 = vsub.s32 %v760, %v762
    %v764 = vrot.slane %v756, %v763
    %v766 = vunpack.c.l.s4 1983009808
    %v767 = vunpack.c.0.s8 %v766
    %v768 = vlaneseq
    %v769 = vshrl.u32 %v768, 7
    %v770 = vsub.s32 %v767, %v769
    %v771 = vrot.slane %v757, %v770
    %v772 = vcombine.low %v449, %v451
    %v773 = vcombine.high %v449, %v451
    %v775 = vunpack.c.l.s4 1983009808
    %v776 = vunpack.c.0.s8 %v775
    %v777 = vlaneseq
    %v778 = vshrl.u32 %v777, 7
    %v779 = vsub.s32 %v776, %v778
    %v780 = vrot.slane %v772, %v779
    %v782 = vunpack.c.l.s4 1983009808
    %v783 = vunpack.c.0.s8 %v782
    %v784 = vlaneseq
    %v785 = vshrl.u32 %v784, 7
    %v786 = vsub.s32 %v783, %v785
    %v787 = vrot.slane %v773, %v786
    %v788 = vcombine.low %v732, %v748
    %v789 = vcombine.high %v732, %v748
    %v791 = vunpack.c.l.s4 1934713408
    %v792 = vunpack.c.0.s8 %v791
    %v793 = vlaneseq
    %v794 = vshrl.u32 %v793, 7
    %v795 = vsub.s32 %v792, %v794
    %v796 = vrot.slane %v788, %v795
    %v798 = vunpack.c.l.s4 1934713408
    %v799 = vunpack.c.0.s8 %v798
    %v800 = vlaneseq
    %v801 = vshrl.u32 %v800, 7
    %v802 = vsub.s32 %v799, %v801
    %v803 = vrot.slane %v789, %v802
    %v804 = vcombine.low %v739, %v755
    %v805 = vcombine.high %v739, %v755
    %v807 = vunpack.c.l.s4 1934713408
    %v808 = vunpack.c.0.s8 %v807
    %v809 = vlaneseq
    %v810 = vshrl.u32 %v809, 7
    %v811 = vsub.s32 %v808, %v810
    %v812 = vrot.slane %v804, %v811
    %v814 = vunpack.c.l.s4 1934713408
    %v815 = vunpack.c.0.s8 %v814
    %v816 = vlaneseq
    %v817 = vshrl.u32 %v816, 7
    %v818 = vsub.s32 %v815, %v817
    %v819 = vrot.slane %v805, %v818
    %v820 = vcombine.low %v764, %v780
    %v821 = vcombine.high %v764, %v780
    %v823 = vunpack.c.l.s4 1934713408
    %v824 = vunpack.c.0.s8 %v823
    %v825 = vlaneseq
    %v826 = vshrl.u32 %v825, 7
    %v827 = vsub.s32 %v824, %v826
    %v828 = vrot.slane %v820, %v827
    %v830 = vunpack.c.l.s4 1934713408
    %v831 = vunpack.c.0.s8 %v830
    %v832 = vlaneseq
    %v833 = vshrl.u32 %v832, 7
    %v834 = vsub.s32 %v831, %v833
    %v835 = vrot.slane %v821, %v834
    %v836 = vcombine.low %v771, %v787
    %v837 = vcombine.high %v771, %v787
    %v839 = vunpack.c.l.s4 1934713408
    %v840 = vunpack.c.0.s8 %v839
    %v841 = vlaneseq
    %v842 = vshrl.u32 %v841, 7
    %v843 = vsub.s32 %v840, %v842
    %v844 = vrot.slane %v836, %v843
    %v846 = vunpack.c.l.s4 1934713408
    %v847 = vunpack.c.0.s8 %v846
    %v848 = vlaneseq
    %v849 = vshrl.u32 %v848, 7
    %v850 = vsub.s32 %v847, %v849
    %v851 = vrot.slane %v837, %v850
    %v852 = vcombine.low %v796, %v828
    %v853 = vcombine.high %v796, %v828
    %v854 = vcombine.low %v803, %v835
    %v855 = vcombine.high %v803, %v835
    %v856 = vcombine.low %v812, %v844
    %v857 = vcombine.high %v812, %v844
    %v858 = vcombine.low %v819, %v851
    %v859 = vcombine.high %v819, %v851
    %v860 = vcombine.low %v648, %v650
    %v861 = vcombine.high %v648, %v650
    %v863 = vunpack.c.l.s4 1983009808
    %v864 = vunpack.c.0.s8 %v863
    %v865 = vlaneseq
    %v866 = vshrl.u32 %v865, 7
    %v867 = vsub.s32 %v864, %v866
    %v868 = vrot.slane %v860, %v867
    %v870 = vunpack.c.l.s4 1983009808
    %v871 = vunpack.c.0.s8 %v870
    %v872 = vlaneseq
    %v873 = vshrl.u32 %v872, 7
    %v874 = vsub.s32 %v871, %v873
    %v875 = vrot.slane %v861, %v874
    %v876 = vcombine.low %v649, %v651
    %v877 = vcombine.high %v649, %v651
    %v879 = vunpack.c.l.s4 1983009808
    %v880 = vunpack.c.0.s8 %v879
    %v881 = vlaneseq
    %v882 = vshrl.u32 %v881, 7
    %v883 = vsub.s32 %v880, %v882
    %v884 = vrot.slane %v876, %v883
    %v886 = vunpack.c.l.s4 1983009808
    %v887 = vunpack.c.0.s8 %v886
    %v888 = vlaneseq
    %v889 = vshrl.u32 %v888, 7
    %v890 = vsub.s32 %v887, %v889
    %v891 = vrot.slane %v877, %v890
    %v892 = vcombine.low %v652, %v654
    %v893 = vcombine.high %v652, %v654
    %v895 = vunpack.c.l.s4 1983009808
    %v896 = vunpack.c.0.s8 %v895
    %v897 = vlaneseq
    %v898 = vshrl.u32 %v897, 7
    %v899 = vsub.s32 %v896, %v898
    %v900 = vrot.slane %v892, %v899
    %v902 = vunpack.c.l.s4 1983009808
    %v903 = vunpack.c.0.s8 %v902
    %v904 = vlaneseq
    %v905 = vshrl.u32 %v904, 7
    %v906 = vsub.s32 %v903, %v905
    %v907 = vrot.slane %v893, %v906
    %v908 = vcombine.low %v653, %v655
    %v909 = vcombine.high %v653, %v655
    %v911 = vunpack.c.l.s4 1983009808
    %v912 = vunpack.c.0.s8 %v911
    %v913 = vlaneseq
    %v914 = vshrl.u32 %v913, 7
    %v915 = vsub.s32 %v912, %v914
    %v916 = vrot.slane %v908, %v915
    %v918 = vunpack.c.l.s4 1983009808
    %v919 = vunpack.c.0.s8 %v918
    %v920 = vlaneseq
    %v921 = vshrl.u32 %v920, 7
    %v922 = vsub.s32 %v919, %v921
    %v923 = vrot.slane %v909, %v922
    %v924 = vcombine.low %v868, %v884
    %v925 = vcombine.high %v868, %v884
    %v927 = vunpack.c.l.s4 1934713408
    %v928 = vunpack.c.0.s8 %v927
    %v929 = vlaneseq
    %v930 = vshrl.u32 %v929, 7
    %v931 = vsub.s32 %v928, %v930
    %v932 = vrot.slane %v924, %v931
    %v934 = vunpack.c.l.s4 1934713408
    %v935 = vunpack.c.0.s8 %v934
    %v936 = vlaneseq
    %v937 = vshrl.u32 %v936, 7
    %v938 = vsub.s32 %v935, %v937
    %v939 = vrot.slane %v925, %v938
    %v940 = vcombine.low %v875, %v891
    %v941 = vcombine.high %v875, %v891
    %v943 = vunpack.c.l.s4 1934713408
    %v944 = vunpack.c.0.s8 %v943
    %v945 = vlaneseq
    %v946 = vshrl.u32 %v945, 7
    %v947 = vsub.s32 %v944, %v946
    %v948 = vrot.slane %v940, %v947
    %v950 = vunpack.c.l.s4 1934713408
    %v951 = vunpack.c.0.s8 %v950
    %v952 = vlaneseq
    %v953 = vshrl.u32 %v952, 7
    %v954 = vsub.s32 %v951, %v953
    %v955 = vrot.slane %v941, %v954
    %v956 = vcombine.low %v900, %v916
    %v957 = vcombine.high %v900, %v916
    %v959 = vunpack.c.l.s4 1934713408
    %v960 = vunpack.c.0.s8 %v959
    %v961 = vlaneseq
    %v962 = vshrl.u32 %v961, 7
    %v963 = vsub.s32 %v960, %v962
    %v964 = vrot.slane %v956, %v963
    %v966 = vunpack.c.l.s4 1934713408
    %v967 = vunpack.c.0.s8 %v966
    %v968 = vlaneseq
    %v969 = vshrl.u32 %v968, 7
    %v970 = vsub.s32 %v967, %v969
    %v971 = vrot.slane %v957, %v970
    %v972 = vcombine.low %v907, %v923
    %v973 = vcombine.high %v907, %v923
    %v975 = vunpack.c.l.s4 1934713408
    %v976 = vunpack.c.0.s8 %v975
    %v977 = vlaneseq
    %v978 = vshrl.u32 %v977, 7
    %v979 = vsub.s32 %v976, %v978
    %v980 = vrot.slane %v972, %v979
    %v982 = vunpack.c.l.s4 1934713408
    %v983 = vunpack.c.0.s8 %v982
    %v984 = vlaneseq
    %v985 = vshrl.u32 %v984, 7
    %v986 = vsub.s32 %v983, %v985
    %v987 = vrot.slane %v973, %v986
    %v988 = vcombine.low %v932, %v964
    %v989 = vcombine.high %v932, %v964
    %v990 = vcombine.low %v939, %v971
    %v991 = vcombine.high %v939, %v971
    %v992 = vcombine.low %v948, %v980
    %v993 = vcombine.high %v948, %v980
    %v994 = vcombine.low %v955, %v987
    %v995 = vcombine.high %v955, %v987
    %v996 = vcombine.low %v492, %v499
    %v998 = vunpack.c.l.s4 1983009808
    %v999 = vunpack.c.0.s8 %v998
    %v1000 = vlaneseq
    %v1001 = vshrl.u32 %v1000, 7
    %v1002 = vsub.s32 %v999, %v1001
    %v1003 = vrot.slane %v996, %v1002
    %v1004 = vcombine.low %v516, %v517
    %v1006 = vunpack.c.l.s4 1983009808
    %v1007 = vunpack.c.0.s8 %v1006
    %v1008 = vlaneseq
    %v1009 = vshrl.u32 %v1008, 7
    %v1010 = vsub.s32 %v1007, %v1009
    %v1011 = vrot.slane %v1004, %v1010
    %v1012 = vcombine.low %v508, %v515
    %v1014 = vunpack.c.l.s4 1983009808
    %v1015 = vunpack.c.0.s8 %v1014
    %v1016 = vlaneseq
    %v1017 = vshrl.u32 %v1016, 7
    %v1018 = vsub.s32 %v1015, %v1017
    %v1019 = vrot.slane %v1012, %v1018
    %v1020 = vcombine.low %v518, %v519
    %v1022 = vunpack.c.l.s4 1983009808
    %v1023 = vunpack.c.0.s8 %v1022
    %v1024 = vlaneseq
    %v1025 = vshrl.u32 %v1024, 7
    %v1026 = vsub.s32 %v1023, %v1025
    %v1027 = vrot.slane %v1020, %v1026
    %v1028 = vcombine.low %v1003, %v1011
    %v1029 = vcombine.high %v1003, %v1011
    %v1031 = vunpack.c.l.s4 1934713408
    %v1032 = vunpack.c.0.s8 %v1031
    %v1033 = vlaneseq
    %v1034 = vshrl.u32 %v1033, 7
    %v1035 = vsub.s32 %v1032, %v1034
    %v1036 = vrot.slane %v1028, %v1035
    %v1038 = vunpack.c.l.s4 1934713408
    %v1039 = vunpack.c.0.s8 %v1038
    %v1040 = vlaneseq
    %v1041 = vshrl.u32 %v1040, 7
    %v1042 = vsub.s32 %v1039, %v1041
    %v1043 = vrot.slane %v1029, %v1042
    %v1044 = vcombine.low %v1019, %v1027
    %v1045 = vcombine.high %v1019, %v1027
    %v1047 = vunpack.c.l.s4 1934713408
    %v1048 = vunpack.c.0.s8 %v1047
    %v1049 = vlaneseq
    %v1050 = vshrl.u32 %v1049, 7
    %v1051 = vsub.s32 %v1048, %v1050
    %v1052 = vrot.slane %v1044, %v1051
    %v1054 = vunpack.c.l.s4 1934713408
    %v1055 = vunpack.c.0.s8 %v1054
    %v1056 = vlaneseq
    %v1057 = vshrl.u32 %v1056, 7
    %v1058 = vsub.s32 %v1055, %v1057
    %v1059 = vrot.slane %v1045, %v1058
    %v1060 = vcombine.low %v1036, %v1052
    %v1061 = vcombine.high %v1036, %v1052
    %v1062 = vcombine.low %v1043, %v1059
    %v1063 = vcombine.high %v1043, %v1059
    %v1064 = vcombine.low %v696, %v703
    %v1066 = vunpack.c.l.s4 1983009808
    %v1067 = vunpack.c.0.s8 %v1066
    %v1068 = vlaneseq
    %v1069 = vshrl.u32 %v1068, 7
    %v1070 = vsub.s32 %v1067, %v1069
    %v1071 = vrot.slane %v1064, %v1070
    %v1072 = vcombine.low %v720, %v721
    %v1074 = vunpack.c.l.s4 1983009808
    %v1075 = vunpack.c.0.s8 %v1074
    %v1076 = vlaneseq
    %v1077 = vshrl.u32 %v1076, 7
    %v1078 = vsub.s32 %v1075, %v1077
    %v1079 = vrot.slane %v1072, %v1078
    %v1080 = vcombine.low %v712, %v719
    %v1082 = vunpack.c.l.s4 1983009808
    %v1083 = vunpack.c.0.s8 %v1082
    %v1084 = vlaneseq
    %v1085 = vshrl.u32 %v1084, 7
    %v1086 = vsub.s32 %v1083, %v1085
    %v1087 = vrot.slane %v1080, %v1086
    %v1088 = vcombine.low %v722, %v723
    %v1090 = vunpack.c.l.s4 1983009808
    %v1091 = vunpack.c.0.s8 %v1090
    %v1092 = vlaneseq
    %v1093 = vshrl.u32 %v1092, 7
    %v1094 = vsub.s32 %v1091, %v1093
    %v1095 = vrot.slane %v1088, %v1094
    %v1096 = vcombine.low %v1071, %v1079
    %v1097 = vcombine.high %v1071, %v1079
    %v1099 = vunpack.c.l.s4 1934713408
    %v1100 = vunpack.c.0.s8 %v1099
    %v1101 = vlaneseq
    %v1102 = vshrl.u32 %v1101, 7
    %v1103 = vsub.s32 %v1100, %v1102
    %v1104 = vrot.slane %v1096, %v1103
    %v1106 = vunpack.c.l.s4 1934713408
    %v1107 = vunpack.c.0.s8 %v1106
    %v1108 = vlaneseq
    %v1109 = vshrl.u32 %v1108, 7
    %v1110 = vsub.s32 %v1107, %v1109
    %v1111 = vrot.slane %v1097, %v1110
    %v1112 = vcombine.low %v1087, %v1095
    %v1113 = vcombine.high %v1087, %v1095
    %v1115 = vunpack.c.l.s4 1934713408
    %v1116 = vunpack.c.0.s8 %v1115
    %v1117 = vlaneseq
    %v1118 = vshrl.u32 %v1117, 7
    %v1119 = vsub.s32 %v1116, %v1118
    %v1120 = vrot.slane %v1112, %v1119
    %v1122 = vunpack.c.l.s4 1934713408
    %v1123 = vunpack.c.0.s8 %v1122
    %v1124 = vlaneseq
    %v1125 = vshrl.u32 %v1124, 7
    %v1126 = vsub.s32 %v1123, %v1125
    %v1127 = vrot.slane %v1113, %v1126
    %v1128 = vcombine.low %v1104, %v1120
    %v1129 = vcombine.high %v1104, %v1120
    %v1130 = vcombine.low %v1111, %v1127
    %v1131 = vcombine.high %v1111, %v1127
    %v1132 = vld [vmem:[%s1] sm:$0xff]
    %v1133 = vld [vmem:[%s1 + $0x8] sm:$0xff]
    %v1134 = vld [vmem:[%s1 + $0x10] sm:$0xff]
    %v1135 = vld [vmem:[%s1 + $0x18] sm:$0xff]
    %v1136 = vld [vmem:[%s1 + $0x20] sm:$0xff]
    %v1137 = vld [vmem:[%s1 + $0x28] sm:$0xff]
    %v1138 = vld [vmem:[%s1 + $0x30] sm:$0xff]
    %v1139 = vld [vmem:[%s1 + $0x38] sm:$0xff]
    %vm1140 = vcmask 64512
    %v1142 = vsel %vm1140, %v852, 0
    %v1145 = vsel %vm1140, %v988, 0
    %v1148 = vsel %vm1140, %v853, 0
    %v1151 = vsel %vm1140, %v989, 0
    %v1154 = vsel %vm1140, %v854, 0
    %v1157 = vsel %vm1140, %v990, 0
    %v1160 = vsel %vm1140, %v855, 0
    %v1163 = vsel %vm1140, %v991, 0
    %v1166 = vsel %vm1140, %v856, 0
    %v1169 = vsel %vm1140, %v992, 0
    %v1172 = vsel %vm1140, %v857, 0
    %v1175 = vsel %vm1140, %v993, 0
    %v1178 = vsel %vm1140, %v858, 0
    %v1181 = vsel %vm1140, %v994, 0
    %v1184 = vsel %vm1140, %v859, 0
    %v1187 = vsel %vm1140, %v995, 0
    %1189 = vmatprep.subr.mxu0 0.0
    %1190 = vmatpush1.xpose.msra.mxu0 0.0
    %1191 = vmatprep.subr.mxu0 0.0
    %1192 = vmatpush1.xpose.msra.mxu0 0.0
    %1193 = vmatprep.subr.mxu0 0.0
    %1194 = vmatpush1.xpose.msra.mxu0 0.0
    %1195 = vmatprep.subr.mxu0 0.0
    %1196 = vmatpush1.xpose.msra.mxu0 0.0
    %1197 = vmatprep.subr.mxu0 0.0
    %1198 = vmatpush1.xpose.msra.mxu0 0.0
    %1199 = vmatprep.subr.mxu0 0.0
    %1200 = vmatpush1.xpose.msra.mxu0 0.0
    %1201 = vmatprep.subr.mxu0 0.0
    %1202 = vmatpush1.xpose.msra.mxu0 0.0
    %1203 = vmatprep.subr.mxu0 0.0
    %1204 = vmatpush1.xpose.msra.mxu0 0.0
    %1205 = vmatprep.subr.mxu0 0.0
    %1206 = vmatpush1.xpose.msra.mxu0 %v1187
    %1207 = vmatprep.subr.mxu0 0.0
    %1208 = vmatpush1.xpose.msra.mxu0 %v1184
    %1209 = vmatprep.subr.mxu0 0.0
    %1210 = vmatpush1.xpose.msra.mxu0 %v1181
    %1211 = vmatprep.subr.mxu0 0.0
    %1212 = vmatpush1.xpose.msra.mxu0 %v1178
    %1213 = vmatprep.subr.mxu0 0.0
    %1214 = vmatpush1.xpose.msra.mxu0 %v1175
    %1215 = vmatprep.subr.mxu0 0.0
    %1216 = vmatpush1.xpose.msra.mxu0 %v1172
    %1217 = vmatprep.subr.mxu0 0.0
    %1218 = vmatpush1.xpose.msra.mxu0 %v1169
    %1219 = vmatprep.subr.mxu0 0.0
    %1220 = vmatpush1.xpose.msra.mxu0 %v1166
    %1221 = vmatprep.subr.mxu0 0.0
    %1222 = vmatpush2.xpose.msra.mxu0 0.0
    %1223 = vmatprep.subr.mxu0 0.0
    %1224 = vmatpush2.xpose.msra.mxu0 0.0
    %1225 = vmatprep.subr.mxu0 0.0
    %1226 = vmatpush2.xpose.msra.mxu0 0.0
    %1227 = vmatprep.subr.mxu0 0.0
    %1228 = vmatpush2.xpose.msra.mxu0 0.0
    %1229 = vmatprep.subr.mxu0 0.0
    %1230 = vmatpush2.xpose.msra.mxu0 0.0
    %1231 = vmatprep.subr.mxu0 0.0
    %1232 = vmatpush2.xpose.msra.mxu0 0.0
    %1233 = vmatprep.subr.mxu0 0.0
    %1234 = vmatpush2.xpose.msra.mxu0 0.0
    %1235 = vmatprep.subr.mxu0 0.0
    %1236 = vmatpush2.xpose.msra.mxu0 0.0
    %1237 = vmatprep.subr.mxu0 0.0
    %1238 = vmatpush2.xpose.msra.mxu0 0.0
    %1239 = vmatprep.subr.mxu0 0.0
    %1240 = vmatpush2.xpose.msra.mxu0 0.0
    %1241 = vmatprep.subr.mxu0 0.0
    %1242 = vmatpush2.xpose.msra.mxu0 0.0
    %1243 = vmatprep.subr.mxu0 0.0
    %1244 = vmatpush2.xpose.msra.mxu0 0.0
    %1245 = vmatprep.subr.mxu0 0.0
    %1246 = vmatpush2.xpose.msra.mxu0 0.0
    %1247 = vmatprep.subr.mxu0 0.0
    %1248 = vmatpush2.xpose.msra.mxu0 0.0
    %1249 = vmatprep.subr.mxu0 0.0
    %1250 = vmatpush2.xpose.msra.mxu0 0.0
    %1251 = vmatprep.subr.mxu0 0.0
    %1252 = vmatpush2.xpose.msra.mxu0 0.0
    %1253 = vmatprep.mubr.f32.mxu0 0.0
    %1254 = vmatmul.mubr.f32.gmra.mxu0 %v1142
    %v1255 = vpop.f32.mrf.mxu0
    %v1256 = vadd.f32 %v1132, %v1255
    %v1257 = vpop.f32.mrf.mxu0
    %1258 = vmatprep.mubr.f32.mxu0 0.0
    %1259 = vmatmul.mubr.f32.gmra.mxu0 %v1145
    %v1260 = vpop.f32.mrf.mxu0
    %v1261 = vadd.f32 %v1133, %v1260
    %v1262 = vpop.f32.mrf.mxu0
    %1263 = vmatprep.mubr.f32.mxu0 0.0
    %1264 = vmatmul.mubr.f32.gmra.mxu0 %v1148
    %v1265 = vpop.f32.mrf.mxu0
    %v1266 = vadd.f32 %v1134, %v1265
    %v1267 = vpop.f32.mrf.mxu0
    %1268 = vmatprep.mubr.f32.mxu0 0.0
    %1269 = vmatmul.mubr.f32.gmra.mxu0 %v1151
    %v1270 = vpop.f32.mrf.mxu0
    %v1271 = vadd.f32 %v1135, %v1270
    %v1272 = vpop.f32.mrf.mxu0
    %1273 = vmatprep.mubr.f32.mxu0 0.0
    %1274 = vmatmul.mubr.f32.gmra.mxu0 %v1154
    %v1275 = vpop.f32.mrf.mxu0
    %v1276 = vadd.f32 %v1136, %v1275
    %v1277 = vpop.f32.mrf.mxu0
    %1278 = vmatprep.mubr.f32.mxu0 0.0
    %1279 = vmatmul.mubr.f32.gmra.mxu0 %v1157
    %v1280 = vpop.f32.mrf.mxu0
    %v1281 = vadd.f32 %v1137, %v1280
    %v1282 = vpop.f32.mrf.mxu0
    %1283 = vmatprep.mubr.f32.mxu0 0.0
    %1284 = vmatmul.mubr.f32.gmra.mxu0 %v1160
    %v1285 = vpop.f32.mrf.mxu0
    %v1286 = vadd.f32 %v1138, %v1285
    %v1287 = vpop.f32.mrf.mxu0
    %1288 = vmatprep.mubr.f32.mxu0 0.0
    %1289 = vmatmul.mubr.f32.gmra.mxu0 %v1163
    %v1290 = vpop.f32.mrf.mxu0
    %v1291 = vadd.f32 %v1139, %v1290
    %v1292 = vpop.f32.mrf.mxu0
    %1293 = vdwg.mxu0
    %vm1294 = vcmask 523264
    %v1295 = vsel %vm1294, %v1256, -inf
    %1296 = vmax.xlane.f32.xlu0 %v1295
    %v1297 = vpop.xlane.xlu0 %1296
    %v1298 = vsel %vm1294, %v1261, -inf
    %1299 = vmax.xlane.f32.xlu0 %v1298
    %v1300 = vpop.xlane.xlu0 %1299
    %v1301 = vsel %vm1294, %v1266, -inf
    %1302 = vmax.xlane.f32.xlu0 %v1301
    %v1303 = vpop.xlane.xlu0 %1302
    %v1304 = vsel %vm1294, %v1271, -inf
    %1305 = vmax.xlane.f32.xlu0 %v1304
    %v1306 = vpop.xlane.xlu0 %1305
    %v1307 = vsel %vm1294, %v1276, -inf
    %1308 = vmax.xlane.f32.xlu0 %v1307
    %v1309 = vpop.xlane.xlu0 %1308
    %v1310 = vsel %vm1294, %v1281, -inf
    %1311 = vmax.xlane.f32.xlu0 %v1310
    %v1312 = vpop.xlane.xlu0 %1311
    %v1313 = vsel %vm1294, %v1286, -inf
    %1314 = vmax.xlane.f32.xlu0 %v1313
    %v1315 = vpop.xlane.xlu0 %1314
    %v1316 = vsel %vm1294, %v1291, -inf
    %1317 = vmax.xlane.f32.xlu0 %v1316
    %v1318 = vpop.xlane.xlu0 %1317
    %v1319 = vsub.f32 %v1256, %v1297
    %v1320 = vsub.f32 %v1261, %v1300
    %v1321 = vsub.f32 %v1266, %v1303
    %v1322 = vsub.f32 %v1271, %v1306
    %v1323 = vsub.f32 %v1276, %v1309
    %v1324 = vsub.f32 %v1281, %v1312
    %v1325 = vsub.f32 %v1286, %v1315
    %v1326 = vsub.f32 %v1291, %v1318
    %v1327 = vmul.f32 %v1319, 1.442695
    %v1328 = vpow.pop %v1327
    %v1329 = vmul.f32 %v1320, 1.442695
    %v1330 = vpow.pop %v1329
    %v1331 = vmul.f32 %v1321, 1.442695
    %v1332 = vpow.pop %v1331
    %v1333 = vmul.f32 %v1322, 1.442695
    %v1334 = vpow.pop %v1333
    %v1335 = vmul.f32 %v1323, 1.442695
    %v1336 = vpow.pop %v1335
    %v1337 = vmul.f32 %v1324, 1.442695
    %v1338 = vpow.pop %v1337
    %v1339 = vmul.f32 %v1325, 1.442695
    %v1340 = vpow.pop %v1339
    %v1341 = vmul.f32 %v1326, 1.442695
    %v1342 = vpow.pop %v1341
    %v1343 = vsel %vm1294, %v1328, 0.0
    %1344 = vadd.xlane.f32.xlu0 %v1343
    %v1345 = vpop.xlane.xlu0 %1344
    %v1346 = vsel %vm1294, %v1330, 0.0
    %1347 = vadd.xlane.f32.xlu0 %v1346
    %v1348 = vpop.xlane.xlu0 %1347
    %v1349 = vsel %vm1294, %v1332, 0.0
    %1350 = vadd.xlane.f32.xlu0 %v1349
    %v1351 = vpop.xlane.xlu0 %1350
    %v1352 = vsel %vm1294, %v1334, 0.0
    %1353 = vadd.xlane.f32.xlu0 %v1352
    %v1354 = vpop.xlane.xlu0 %1353
    %v1355 = vsel %vm1294, %v1336, 0.0
    %1356 = vadd.xlane.f32.xlu0 %v1355
    %v1357 = vpop.xlane.xlu0 %1356
    %v1358 = vsel %vm1294, %v1338, 0.0
    %1359 = vadd.xlane.f32.xlu0 %v1358
    %v1360 = vpop.xlane.xlu0 %1359
    %v1361 = vsel %vm1294, %v1340, 0.0
    %1362 = vadd.xlane.f32.xlu0 %v1361
    %v1363 = vpop.xlane.xlu0 %1362
    %v1364 = vsel %vm1294, %v1342, 0.0
    %1365 = vadd.xlane.f32.xlu0 %v1364
    %v1366 = vpop.xlane.xlu0 %1365
    %v1367 = vrcp.pop %v1345
    %v1368 = vrcp.pop %v1348
    %v1369 = vrcp.pop %v1351
    %v1370 = vrcp.pop %v1354
    %v1371 = vrcp.pop %v1357
    %v1372 = vrcp.pop %v1360
    %v1373 = vrcp.pop %v1363
    %v1374 = vrcp.pop %v1366
    %v1375 = vmul.f32 %v1328, %v1367
    %v1376 = vmul.f32 %v1330, %v1368
    %v1377 = vmul.f32 %v1332, %v1369
    %v1378 = vmul.f32 %v1334, %v1370
    %v1379 = vmul.f32 %v1336, %v1371
    %v1380 = vmul.f32 %v1338, %v1372
    %v1381 = vmul.f32 %v1340, %v1373
    %v1382 = vmul.f32 %v1342, %v1374
    %v1383 = vld [vmem:[%s1 + $0x40] sm:$0xff]
    %v1384 = vld [vmem:[%s1 + $0x48] sm:$0xff]
    %v1385 = vld [vmem:[%s1 + $0x50] sm:$0xff]
    %v1386 = vld [vmem:[%s1 + $0x58] sm:$0xff]
    %v1387 = vld [vmem:[%s1 + $0x60] sm:$0xff]
    %v1388 = vld [vmem:[%s1 + $0x68] sm:$0xff]
    %v1389 = vld [vmem:[%s1 + $0x70] sm:$0xff]
    %v1390 = vld [vmem:[%s1 + $0x78] sm:$0xff]
    %v1391 = vmul.f32 %v1375, %v1383
    %v1392 = vmul.f32 %v1376, %v1384
    %v1393 = vmul.f32 %v1377, %v1385
    %v1394 = vmul.f32 %v1378, %v1386
    %v1395 = vmul.f32 %v1379, %v1387
    %v1396 = vmul.f32 %v1380, %v1388
    %v1397 = vmul.f32 %v1381, %v1389
    %v1398 = vmul.f32 %v1382, %v1390
    %v1400 = vsel %vm1294, %v1391, 0
    %v1403 = vsel %vm1294, %v1392, 0
    %v1406 = vsel %vm1294, %v1393, 0
    %v1409 = vsel %vm1294, %v1394, 0
    %v1412 = vsel %vm1294, %v1395, 0
    %v1415 = vsel %vm1294, %v1396, 0
    %v1418 = vsel %vm1294, %v1397, 0
    %v1421 = vsel %vm1294, %v1398, 0
    %1423 = vmatprep.subr.mxu0 0.0
    %1424 = vmatpush1.msra.mxu0 0.0
    %1425 = vmatprep.subr.mxu0 0.0
    %1426 = vmatpush1.msra.mxu0 0.0
    %1427 = vmatprep.subr.mxu0 0.0
    %1428 = vmatpush1.msra.mxu0 0.0
    %1429 = vmatprep.subr.mxu0 0.0
    %1430 = vmatpush1.msra.mxu0 0.0
    %1431 = vmatprep.subr.mxu0 0.0
    %1432 = vmatpush1.msra.mxu0 0.0
    %1433 = vmatprep.subr.mxu0 0.0
    %1434 = vmatpush1.msra.mxu0 0.0
    %1435 = vmatprep.subr.mxu0 0.0
    %1436 = vmatpush1.msra.mxu0 0.0
    %1437 = vmatprep.subr.mxu0 0.0
    %1438 = vmatpush1.msra.mxu0 0.0
    %1439 = vmatprep.subr.mxu0 0.0
    %1440 = vmatpush1.msra.mxu0 %v1131
    %1441 = vmatprep.subr.mxu0 0.0
    %1442 = vmatpush1.msra.mxu0 %v1063
    %1443 = vmatprep.subr.mxu0 0.0
    %1444 = vmatpush1.msra.mxu0 %v1130
    %1445 = vmatprep.subr.mxu0 0.0
    %1446 = vmatpush1.msra.mxu0 %v1062
    %1447 = vmatprep.subr.mxu0 0.0
    %1448 = vmatpush1.msra.mxu0 %v1129
    %1449 = vmatprep.subr.mxu0 0.0
    %1450 = vmatpush1.msra.mxu0 %v1061
    %1451 = vmatprep.subr.mxu0 0.0
    %1452 = vmatpush1.msra.mxu0 %v1128
    %1453 = vmatprep.subr.mxu0 0.0
    %1454 = vmatpush1.msra.mxu0 %v1060
    %1455 = vmatprep.subr.mxu0 0.0
    %1456 = vmatpush2.msra.mxu0 0.0
    %1457 = vmatprep.subr.mxu0 0.0
    %1458 = vmatpush2.msra.mxu0 0.0
    %1459 = vmatprep.subr.mxu0 0.0
    %1460 = vmatpush2.msra.mxu0 0.0
    %1461 = vmatprep.subr.mxu0 0.0
    %1462 = vmatpush2.msra.mxu0 0.0
    %1463 = vmatprep.subr.mxu0 0.0
    %1464 = vmatpush2.msra.mxu0 0.0
    %1465 = vmatprep.subr.mxu0 0.0
    %1466 = vmatpush2.msra.mxu0 0.0
    %1467 = vmatprep.subr.mxu0 0.0
    %1468 = vmatpush2.msra.mxu0 0.0
    %1469 = vmatprep.subr.mxu0 0.0
    %1470 = vmatpush2.msra.mxu0 0.0
    %1471 = vmatprep.subr.mxu0 0.0
    %1472 = vmatpush2.msra.mxu0 0.0
    %1473 = vmatprep.subr.mxu0 0.0
    %1474 = vmatpush2.msra.mxu0 0.0
    %1475 = vmatprep.subr.mxu0 0.0
    %1476 = vmatpush2.msra.mxu0 0.0
    %1477 = vmatprep.subr.mxu0 0.0
    %1478 = vmatpush2.msra.mxu0 0.0
    %1479 = vmatprep.subr.mxu0 0.0
    %1480 = vmatpush2.msra.mxu0 0.0
    %1481 = vmatprep.subr.mxu0 0.0
    %1482 = vmatpush2.msra.mxu0 0.0
    %1483 = vmatprep.subr.mxu0 0.0
    %1484 = vmatpush2.msra.mxu0 0.0
    %1485 = vmatprep.subr.mxu0 0.0
    %1486 = vmatpush2.msra.mxu0 0.0
    %1487 = vmatprep.mubr.f32.mxu0 0.0
    %1488 = vmatmul.mubr.f32.gmra.mxu0 %v1400
    %v1489 = vpop.f32.mrf.mxu0
    %v1490 = vadd.f32 0.0, %v1489
    %v1491 = vpop.f32.mrf.mxu0
    %1492 = vmatprep.mubr.f32.mxu0 0.0
    %1493 = vmatmul.mubr.f32.gmra.mxu0 %v1403
    %v1494 = vpop.f32.mrf.mxu0
    %v1495 = vadd.f32 0.0, %v1494
    %v1496 = vpop.f32.mrf.mxu0
    %1497 = vmatprep.mubr.f32.mxu0 0.0
    %1498 = vmatmul.mubr.f32.gmra.mxu0 %v1406
    %v1499 = vpop.f32.mrf.mxu0
    %v1500 = vadd.f32 0.0, %v1499
    %v1501 = vpop.f32.mrf.mxu0
    %1502 = vmatprep.mubr.f32.mxu0 0.0
    %1503 = vmatmul.mubr.f32.gmra.mxu0 %v1409
    %v1504 = vpop.f32.mrf.mxu0
    %v1505 = vadd.f32 0.0, %v1504
    %v1506 = vpop.f32.mrf.mxu0
    %1507 = vmatprep.mubr.f32.mxu0 0.0
    %1508 = vmatmul.mubr.f32.gmra.mxu0 %v1412
    %v1509 = vpop.f32.mrf.mxu0
    %v1510 = vadd.f32 0.0, %v1509
    %v1511 = vpop.f32.mrf.mxu0
    %1512 = vmatprep.mubr.f32.mxu0 0.0
    %1513 = vmatmul.mubr.f32.gmra.mxu0 %v1415
    %v1514 = vpop.f32.mrf.mxu0
    %v1515 = vadd.f32 0.0, %v1514
    %v1516 = vpop.f32.mrf.mxu0
    %1517 = vmatprep.mubr.f32.mxu0 0.0
    %1518 = vmatmul.mubr.f32.gmra.mxu0 %v1418
    %v1519 = vpop.f32.mrf.mxu0
    %v1520 = vadd.f32 0.0, %v1519
    %v1521 = vpop.f32.mrf.mxu0
    %1522 = vmatprep.mubr.f32.mxu0 0.0
    %1523 = vmatmul.mubr.f32.gmra.mxu0 %v1421
    %v1524 = vpop.f32.mrf.mxu0
    %v1525 = vadd.f32 0.0, %v1524
    %v1526 = vpop.f32.mrf.mxu0
    %1527 = vdwg.mxu0
    %v1528 = vcombine.low %v1490, %v1510
    %v1529 = vcombine.high %v1490, %v1510
    %v1531 = vunpack.c.l.s4 1983009808
    %v1532 = vunpack.c.0.s8 %v1531
    %v1533 = vlaneseq
    %v1534 = vshrl.u32 %v1533, 7
    %v1535 = vsub.s32 %v1532, %v1534
    %v1536 = vrot.slane %v1528, %v1535
    %v1538 = vunpack.c.l.s4 1983009808
    %v1539 = vunpack.c.0.s8 %v1538
    %v1540 = vlaneseq
    %v1541 = vshrl.u32 %v1540, 7
    %v1542 = vsub.s32 %v1539, %v1541
    %v1543 = vrot.slane %v1529, %v1542
    %v1544 = vcombine.low %v1500, %v1520
    %v1545 = vcombine.high %v1500, %v1520
    %v1547 = vunpack.c.l.s4 1983009808
    %v1548 = vunpack.c.0.s8 %v1547
    %v1549 = vlaneseq
    %v1550 = vshrl.u32 %v1549, 7
    %v1551 = vsub.s32 %v1548, %v1550
    %v1552 = vrot.slane %v1544, %v1551
    %v1554 = vunpack.c.l.s4 1983009808
    %v1555 = vunpack.c.0.s8 %v1554
    %v1556 = vlaneseq
    %v1557 = vshrl.u32 %v1556, 7
    %v1558 = vsub.s32 %v1555, %v1557
    %v1559 = vrot.slane %v1545, %v1558
    %v1560 = vcombine.low %v1536, %v1552
    %v1561 = vcombine.high %v1536, %v1552
    %v1563 = vunpack.c.l.s4 1934713408
    %v1564 = vunpack.c.0.s8 %v1563
    %v1565 = vlaneseq
    %v1566 = vshrl.u32 %v1565, 7
    %v1567 = vsub.s32 %v1564, %v1566
    %v1568 = vrot.slane %v1560, %v1567
    %v1570 = vunpack.c.l.s4 1934713408
    %v1571 = vunpack.c.0.s8 %v1570
    %v1572 = vlaneseq
    %v1573 = vshrl.u32 %v1572, 7
    %v1574 = vsub.s32 %v1571, %v1573
    %v1575 = vrot.slane %v1561, %v1574
    %v1576 = vcombine.low %v1543, %v1559
    %v1577 = vcombine.high %v1543, %v1559
    %v1579 = vunpack.c.l.s4 1934713408
    %v1580 = vunpack.c.0.s8 %v1579
    %v1581 = vlaneseq
    %v1582 = vshrl.u32 %v1581, 7
    %v1583 = vsub.s32 %v1580, %v1582
    %v1584 = vrot.slane %v1576, %v1583
    %v1586 = vunpack.c.l.s4 1934713408
    %v1587 = vunpack.c.0.s8 %v1586
    %v1588 = vlaneseq
    %v1589 = vshrl.u32 %v1588, 7
    %v1590 = vsub.s32 %v1587, %v1589
    %v1591 = vrot.slane %v1577, %v1590
    %v1592 = vcombine.high %v1568, 0.0
    %v1593 = vcombine.high %v1575, 0.0
    %v1594 = vcombine.high %v1584, 0.0
    %v1595 = vcombine.high %v1591, 0.0
    %v1596 = vcombine.low %v1495, %v1515
    %v1597 = vcombine.high %v1495, %v1515
    %v1599 = vunpack.c.l.s4 1983009808
    %v1600 = vunpack.c.0.s8 %v1599
    %v1601 = vlaneseq
    %v1602 = vshrl.u32 %v1601, 7
    %v1603 = vsub.s32 %v1600, %v1602
    %v1604 = vrot.slane %v1596, %v1603
    %v1606 = vunpack.c.l.s4 1983009808
    %v1607 = vunpack.c.0.s8 %v1606
    %v1608 = vlaneseq
    %v1609 = vshrl.u32 %v1608, 7
    %v1610 = vsub.s32 %v1607, %v1609
    %v1611 = vrot.slane %v1597, %v1610
    %v1612 = vcombine.low %v1505, %v1525
    %v1613 = vcombine.high %v1505, %v1525
    %v1615 = vunpack.c.l.s4 1983009808
    %v1616 = vunpack.c.0.s8 %v1615
    %v1617 = vlaneseq
    %v1618 = vshrl.u32 %v1617, 7
    %v1619 = vsub.s32 %v1616, %v1618
    %v1620 = vrot.slane %v1612, %v1619
    %v1622 = vunpack.c.l.s4 1983009808
    %v1623 = vunpack.c.0.s8 %v1622
    %v1624 = vlaneseq
    %v1625 = vshrl.u32 %v1624, 7
    %v1626 = vsub.s32 %v1623, %v1625
    %v1627 = vrot.slane %v1613, %v1626
    %v1628 = vcombine.low %v1604, %v1620
    %v1629 = vcombine.high %v1604, %v1620
    %v1631 = vunpack.c.l.s4 1934713408
    %v1632 = vunpack.c.0.s8 %v1631
    %v1633 = vlaneseq
    %v1634 = vshrl.u32 %v1633, 7
    %v1635 = vsub.s32 %v1632, %v1634
    %v1636 = vrot.slane %v1628, %v1635
    %v1638 = vunpack.c.l.s4 1934713408
    %v1639 = vunpack.c.0.s8 %v1638
    %v1640 = vlaneseq
    %v1641 = vshrl.u32 %v1640, 7
    %v1642 = vsub.s32 %v1639, %v1641
    %v1643 = vrot.slane %v1629, %v1642
    %v1644 = vcombine.low %v1611, %v1627
    %v1645 = vcombine.high %v1611, %v1627
    %v1647 = vunpack.c.l.s4 1934713408
    %v1648 = vunpack.c.0.s8 %v1647
    %v1649 = vlaneseq
    %v1650 = vshrl.u32 %v1649, 7
    %v1651 = vsub.s32 %v1648, %v1650
    %v1652 = vrot.slane %v1644, %v1651
    %v1654 = vunpack.c.l.s4 1934713408
    %v1655 = vunpack.c.0.s8 %v1654
    %v1656 = vlaneseq
    %v1657 = vshrl.u32 %v1656, 7
    %v1658 = vsub.s32 %v1655, %v1657
    %v1659 = vrot.slane %v1645, %v1658
    %v1660 = vcombine.high %v1636, 0.0
    %v1661 = vcombine.high %v1643, 0.0
    %v1662 = vcombine.high %v1652, 0.0
    %v1663 = vcombine.high %v1659, 0.0
    %v1664 = vcombine.low %v1568, %v1575
    %v1666 = vunpack.c.l.s4 1983009808
    %v1667 = vunpack.c.0.s8 %v1666
    %v1668 = vlaneseq
    %v1669 = vshrl.u32 %v1668, 7
    %v1670 = vsub.s32 %v1667, %v1669
    %v1671 = vrot.slane %v1664, %v1670
    %v1672 = vcombine.low %v1592, %v1593
    %v1674 = vunpack.c.l.s4 1983009808
    %v1675 = vunpack.c.0.s8 %v1674
    %v1676 = vlaneseq
    %v1677 = vshrl.u32 %v1676, 7
    %v1678 = vsub.s32 %v1675, %v1677
    %v1679 = vrot.slane %v1672, %v1678
    %v1680 = vcombine.low %v1584, %v1591
    %v1682 = vunpack.c.l.s4 1983009808
    %v1683 = vunpack.c.0.s8 %v1682
    %v1684 = vlaneseq
    %v1685 = vshrl.u32 %v1684, 7
    %v1686 = vsub.s32 %v1683, %v1685
    %v1687 = vrot.slane %v1680, %v1686
    %v1688 = vcombine.low %v1594, %v1595
    %v1690 = vunpack.c.l.s4 1983009808
    %v1691 = vunpack.c.0.s8 %v1690
    %v1692 = vlaneseq
    %v1693 = vshrl.u32 %v1692, 7
    %v1694 = vsub.s32 %v1691, %v1693
    %v1695 = vrot.slane %v1688, %v1694
    %v1696 = vcombine.low %v1671, %v1679
    %v1697 = vcombine.high %v1671, %v1679
    %v1699 = vunpack.c.l.s4 1934713408
    %v1700 = vunpack.c.0.s8 %v1699
    %v1701 = vlaneseq
    %v1702 = vshrl.u32 %v1701, 7
    %v1703 = vsub.s32 %v1700, %v1702
    %v1704 = vrot.slane %v1696, %v1703
    %v1706 = vunpack.c.l.s4 1934713408
    %v1707 = vunpack.c.0.s8 %v1706
    %v1708 = vlaneseq
    %v1709 = vshrl.u32 %v1708, 7
    %v1710 = vsub.s32 %v1707, %v1709
    %v1711 = vrot.slane %v1697, %v1710
    %v1712 = vcombine.low %v1687, %v1695
    %v1713 = vcombine.high %v1687, %v1695
    %v1715 = vunpack.c.l.s4 1934713408
    %v1716 = vunpack.c.0.s8 %v1715
    %v1717 = vlaneseq
    %v1718 = vshrl.u32 %v1717, 7
    %v1719 = vsub.s32 %v1716, %v1718
    %v1720 = vrot.slane %v1712, %v1719
    %v1722 = vunpack.c.l.s4 1934713408
    %v1723 = vunpack.c.0.s8 %v1722
    %v1724 = vlaneseq
    %v1725 = vshrl.u32 %v1724, 7
    %v1726 = vsub.s32 %v1723, %v1725
    %v1727 = vrot.slane %v1713, %v1726
    %v1728 = vcombine.low %v1704, %v1720
    %v1729 = vcombine.high %v1704, %v1720
    %v1730 = vcombine.low %v1711, %v1727
    %v1731 = vcombine.high %v1711, %v1727
    %v1732 = vcombine.low %v1636, %v1643
    %v1734 = vunpack.c.l.s4 1983009808
    %v1735 = vunpack.c.0.s8 %v1734
    %v1736 = vlaneseq
    %v1737 = vshrl.u32 %v1736, 7
    %v1738 = vsub.s32 %v1735, %v1737
    %v1739 = vrot.slane %v1732, %v1738
    %v1740 = vcombine.low %v1660, %v1661
    %v1742 = vunpack.c.l.s4 1983009808
    %v1743 = vunpack.c.0.s8 %v1742
    %v1744 = vlaneseq
    %v1745 = vshrl.u32 %v1744, 7
    %v1746 = vsub.s32 %v1743, %v1745
    %v1747 = vrot.slane %v1740, %v1746
    %v1748 = vcombine.low %v1652, %v1659
    %v1750 = vunpack.c.l.s4 1983009808
    %v1751 = vunpack.c.0.s8 %v1750
    %v1752 = vlaneseq
    %v1753 = vshrl.u32 %v1752, 7
    %v1754 = vsub.s32 %v1751, %v1753
    %v1755 = vrot.slane %v1748, %v1754
    %v1756 = vcombine.low %v1662, %v1663
    %v1758 = vunpack.c.l.s4 1983009808
    %v1759 = vunpack.c.0.s8 %v1758
    %v1760 = vlaneseq
    %v1761 = vshrl.u32 %v1760, 7
    %v1762 = vsub.s32 %v1759, %v1761
    %v1763 = vrot.slane %v1756, %v1762
    %v1764 = vcombine.low %v1739, %v1747
    %v1765 = vcombine.high %v1739, %v1747
    %v1767 = vunpack.c.l.s4 1934713408
    %v1768 = vunpack.c.0.s8 %v1767
    %v1769 = vlaneseq
    %v1770 = vshrl.u32 %v1769, 7
    %v1771 = vsub.s32 %v1768, %v1770
    %v1772 = vrot.slane %v1764, %v1771
    %v1774 = vunpack.c.l.s4 1934713408
    %v1775 = vunpack.c.0.s8 %v1774
    %v1776 = vlaneseq
    %v1777 = vshrl.u32 %v1776, 7
    %v1778 = vsub.s32 %v1775, %v1777
    %v1779 = vrot.slane %v1765, %v1778
    %v1780 = vcombine.low %v1755, %v1763
    %v1781 = vcombine.high %v1755, %v1763
    %v1783 = vunpack.c.l.s4 1934713408
    %v1784 = vunpack.c.0.s8 %v1783
    %v1785 = vlaneseq
    %v1786 = vshrl.u32 %v1785, 7
    %v1787 = vsub.s32 %v1784, %v1786
    %v1788 = vrot.slane %v1780, %v1787
    %v1790 = vunpack.c.l.s4 1934713408
    %v1791 = vunpack.c.0.s8 %v1790
    %v1792 = vlaneseq
    %v1793 = vshrl.u32 %v1792, 7
    %v1794 = vsub.s32 %v1791, %v1793
    %v1795 = vrot.slane %v1781, %v1794
    %v1796 = vcombine.low %v1772, %v1788
    %v1797 = vcombine.high %v1772, %v1788
    %v1798 = vcombine.low %v1779, %v1795
    %v1799 = vcombine.high %v1779, %v1795
    %1802 = vrot.lane.b32.xlu0 %v1729, 8
    %v1803 = vpop.permute.xlu0 %1802
    %1804 = vrot.lane.b32.xlu0 %v1797, 8
    %v1805 = vpop.permute.xlu0 %1804
    %1810 = vrot.lane.b32.xlu0 %v1730, 16
    %v1811 = vpop.permute.xlu0 %1810
    %1812 = vrot.lane.b32.xlu0 %v1798, 16
    %v1813 = vpop.permute.xlu0 %1812
    %1818 = vrot.lane.b32.xlu0 %v1731, 24
    %v1819 = vpop.permute.xlu0 %1818
    %1820 = vrot.lane.b32.xlu0 %v1799, 24
    %v1821 = vpop.permute.xlu0 %1820
    %v1824 = vsel %vm1140, %v1728, %v1803
    %v1825 = vsel %vm1140, %v1796, %v1805
    %vm1826 = vcmask 130048
    %v1827 = vsel %vm1826, %v1824, %v1811
    %v1828 = vsel %vm1826, %v1825, %v1813
    %vm1829 = vcmask 195584
    %v1830 = vsel %vm1829, %v1827, %v1819
    %v1831 = vsel %vm1829, %v1828, %v1821
    %v1832 = vld [vmem:[%s2 + $0x10] sm:$0xff]
    %v1833 = vld [vmem:[%s2 + $0x38] sm:$0xff]
    %v1834 = vld [vmem:[%s2 + $0x60] sm:$0xff]
    %v1835 = vld [vmem:[%s2 + $0x88] sm:$0xff]
    %v1836 = vld [vmem:[%s3 + $0x4] sm:$0x1]
    %v1837 = vlaneseq
    %v1838 = vshrl.u32 %v1837, 7
    %v1839 = vsub.s32 0, %v1838
    %v1840 = vrot.slane %v1836, %v1839
    %v1842 = vsel %vm116, %v1830, 0
    %v1845 = vsel %vm116, %v1831, 0
    %1847 = vmatprep.subr.mxu0 0.0
    %1848 = vmatpush1.msra.mxu0 0.0
    %1849 = vmatprep.subr.mxu0 0.0
    %1850 = vmatpush1.msra.mxu0 0.0
    %1851 = vmatprep.subr.mxu0 0.0
    %1852 = vmatpush1.msra.mxu0 0.0
    %1853 = vmatprep.subr.mxu0 0.0
    %1854 = vmatpush1.msra.mxu0 0.0
    %1855 = vmatprep.subr.mxu0 0.0
    %1856 = vmatpush1.msra.mxu0 0.0
    %1857 = vmatprep.subr.mxu0 0.0
    %1858 = vmatpush1.msra.mxu0 0.0
    %1859 = vmatprep.subr.mxu0 0.0
    %1860 = vmatpush1.msra.mxu0 0.0
    %1861 = vmatprep.subr.mxu0 0.0
    %1862 = vmatpush1.msra.mxu0 0.0
    %1863 = vmatprep.subr.mxu0 0.0
    %1864 = vmatpush1.msra.mxu0 0.0
    %1865 = vmatprep.subr.mxu0 0.0
    %1866 = vmatpush1.msra.mxu0 0.0
    %1867 = vmatprep.subr.mxu0 0.0
    %1868 = vmatpush1.msra.mxu0 0.0
    %1869 = vmatprep.subr.mxu0 0.0
    %1870 = vmatpush1.msra.mxu0 0.0
    %1871 = vmatprep.subr.mxu0 0.0
    %1872 = vmatpush1.msra.mxu0 %v1835
    %1873 = vmatprep.subr.mxu0 0.0
    %1874 = vmatpush1.msra.mxu0 %v1834
    %1875 = vmatprep.subr.mxu0 0.0
    %1876 = vmatpush1.msra.mxu0 %v1833
    %1877 = vmatprep.subr.mxu0 0.0
    %1878 = vmatpush1.msra.mxu0 %v1832
    %1879 = vmatprep.subr.mxu0 0.0
    %1880 = vmatpush2.msra.mxu0 0.0
    %1881 = vmatprep.subr.mxu0 0.0
    %1882 = vmatpush2.msra.mxu0 0.0
    %1883 = vmatprep.subr.mxu0 0.0
    %1884 = vmatpush2.msra.mxu0 0.0
    %1885 = vmatprep.subr.mxu0 0.0
    %1886 = vmatpush2.msra.mxu0 0.0
    %1887 = vmatprep.subr.mxu0 0.0
    %1888 = vmatpush2.msra.mxu0 0.0
    %1889 = vmatprep.subr.mxu0 0.0
    %1890 = vmatpush2.msra.mxu0 0.0
    %1891 = vmatprep.subr.mxu0 0.0
    %1892 = vmatpush2.msra.mxu0 0.0
    %1893 = vmatprep.subr.mxu0 0.0
    %1894 = vmatpush2.msra.mxu0 0.0
    %1895 = vmatprep.subr.mxu0 0.0
    %1896 = vmatpush2.msra.mxu0 0.0
    %1897 = vmatprep.subr.mxu0 0.0
    %1898 = vmatpush2.msra.mxu0 0.0
    %1899 = vmatprep.subr.mxu0 0.0
    %1900 = vmatpush2.msra.mxu0 0.0
    %1901 = vmatprep.subr.mxu0 0.0
    %1902 = vmatpush2.msra.mxu0 0.0
    %1903 = vmatprep.subr.mxu0 0.0
    %1904 = vmatpush2.msra.mxu0 0.0
    %1905 = vmatprep.subr.mxu0 0.0
    %1906 = vmatpush2.msra.mxu0 0.0
    %1907 = vmatprep.subr.mxu0 0.0
    %1908 = vmatpush2.msra.mxu0 0.0
    %1909 = vmatprep.subr.mxu0 0.0
    %1910 = vmatpush2.msra.mxu0 0.0
    %1911 = vmatprep.mubr.f32.mxu0 0.0
    %1912 = vmatmul.mubr.f32.gmra.mxu0 %v1842
    %v1913 = vpop.f32.mrf.mxu0
    %v1914 = vadd.f32 %v1840, %v1913
    %v1915 = vpop.f32.mrf.mxu0
    %1916 = vmatprep.mubr.f32.mxu0 0.0
    %1917 = vmatmul.mubr.f32.gmra.mxu0 %v1845
    %v1918 = vpop.f32.mrf.mxu0
    %v1919 = vadd.f32 %v1840, %v1918
    %v1920 = vpop.f32.mrf.mxu0
    %1921 = vdwg.mxu0
    %v1922 = vadd.f32 %v1914, %v108
    %v1923 = vadd.f32 %v1919, %v113
    %v1924 = vsel %vm116, %v1922, 0.0
    %1925 = vadd.xlane.f32.xlu0 %v1924
    %v1926 = vpop.xlane.xlu0 %1925
    %v1927 = vsel %vm116, %v1923, 0.0
    %1928 = vadd.xlane.f32.xlu0 %v1927
    %v1929 = vpop.xlane.xlu0 %1928
    %v1930 = vmul.f32 %v1926, %v123
    %v1931 = vmul.f32 %v1929, %v123
    %v1932 = vsub.f32 %v1922, %v1930
    %v1933 = vsub.f32 %v1923, %v1931
    %v1934 = vmul.f32 %v1932, %v1932
    %v1935 = vmul.f32 %v1933, %v1933
    %v1936 = vsel %vm116, %v1934, 0.0
    %1937 = vadd.xlane.f32.xlu0 %v1936
    %v1938 = vpop.xlane.xlu0 %1937
    %v1939 = vsel %vm116, %v1935, 0.0
    %1940 = vadd.xlane.f32.xlu0 %v1939
    %v1941 = vpop.xlane.xlu0 %1940
    %v1942 = vmul.f32 %v1938, %v123
    %v1943 = vmul.f32 %v1941, %v123
    %v1944 = vadd.f32 %v1942, 1e-06
    %v1945 = vadd.f32 %v1943, 1e-06
    %v1946 = vrsqrt.pop %v1944
    %v1947 = vrsqrt.pop %v1945
    %v1948 = vmul.f32 %v1932, %v1946
    %v1949 = vmul.f32 %v1933, %v1947
    %v1950 = vld [vmem:[%s3 + $0x5] sm:$0x1]
    %v1951 = vlaneseq
    %v1952 = vshrl.u32 %v1951, 7
    %v1953 = vsub.s32 0, %v1952
    %v1954 = vrot.slane %v1950, %v1953
    %v1955 = vmul.f32 %v1948, %v1954
    %v1956 = vmul.f32 %v1949, %v1954
    %v1957 = vld [vmem:[%s3 + $0x6] sm:$0x1]
    %v1958 = vlaneseq
    %v1959 = vshrl.u32 %v1958, 7
    %v1960 = vsub.s32 0, %v1959
    %v1961 = vrot.slane %v1957, %v1960
    %v1962 = vadd.f32 %v1955, %v1961
    %v1963 = vadd.f32 %v1956, %v1961
    %v1964 = vld [vmem:[%s2] sm:$0xff]
    %v1965 = vld [vmem:[%s2 + $0x28] sm:$0xff]
    %v1966 = vld [vmem:[%s2 + $0x50] sm:$0xff]
    %v1967 = vld [vmem:[%s2 + $0x78] sm:$0xff]
    %v1968 = vld [vmem:[%s3 + $0x7] sm:$0x1]
    %v1969 = vlaneseq
    %v1970 = vshrl.u32 %v1969, 7
    %v1971 = vsub.s32 0, %v1970
    %v1972 = vrot.slane %v1968, %v1971
    %v1974 = vsel %vm116, %v1962, 0
    %v1977 = vsel %vm116, %v1963, 0
    %1979 = vmatprep.subr.mxu0 0.0
    %1980 = vmatpush1.msra.mxu0 0.0
    %1981 = vmatprep.subr.mxu0 0.0
    %1982 = vmatpush1.msra.mxu0 0.0
    %1983 = vmatprep.subr.mxu0 0.0
    %1984 = vmatpush1.msra.mxu0 0.0
    %1985 = vmatprep.subr.mxu0 0.0
    %1986 = vmatpush1.msra.mxu0 0.0
    %1987 = vmatprep.subr.mxu0 0.0
    %1988 = vmatpush1.msra.mxu0 0.0
    %1989 = vmatprep.subr.mxu0 0.0
    %1990 = vmatpush1.msra.mxu0 0.0
    %1991 = vmatprep.subr.mxu0 0.0
    %1992 = vmatpush1.msra.mxu0 0.0
    %1993 = vmatprep.subr.mxu0 0.0
    %1994 = vmatpush1.msra.mxu0 0.0
    %1995 = vmatprep.subr.mxu0 0.0
    %1996 = vmatpush1.msra.mxu0 0.0
    %1997 = vmatprep.subr.mxu0 0.0
    %1998 = vmatpush1.msra.mxu0 0.0
    %1999 = vmatprep.subr.mxu0 0.0
    %2000 = vmatpush1.msra.mxu0 0.0
    %2001 = vmatprep.subr.mxu0 0.0
    %2002 = vmatpush1.msra.mxu0 0.0
    %2003 = vmatprep.subr.mxu0 0.0
    %2004 = vmatpush1.msra.mxu0 %v1967
    %2005 = vmatprep.subr.mxu0 0.0
    %2006 = vmatpush1.msra.mxu0 %v1966
    %2007 = vmatprep.subr.mxu0 0.0
    %2008 = vmatpush1.msra.mxu0 %v1965
    %2009 = vmatprep.subr.mxu0 0.0
    %2010 = vmatpush1.msra.mxu0 %v1964
    %2011 = vmatprep.subr.mxu0 0.0
    %2012 = vmatpush2.msra.mxu0 0.0
    %2013 = vmatprep.subr.mxu0 0.0
    %2014 = vmatpush2.msra.mxu0 0.0
    %2015 = vmatprep.subr.mxu0 0.0
    %2016 = vmatpush2.msra.mxu0 0.0
    %2017 = vmatprep.subr.mxu0 0.0
    %2018 = vmatpush2.msra.mxu0 0.0
    %2019 = vmatprep.subr.mxu0 0.0
    %2020 = vmatpush2.msra.mxu0 0.0
    %2021 = vmatprep.subr.mxu0 0.0
    %2022 = vmatpush2.msra.mxu0 0.0
    %2023 = vmatprep.subr.mxu0 0.0
    %2024 = vmatpush2.msra.mxu0 0.0
    %2025 = vmatprep.subr.mxu0 0.0
    %2026 = vmatpush2.msra.mxu0 0.0
    %2027 = vmatprep.subr.mxu0 0.0
    %2028 = vmatpush2.msra.mxu0 0.0
    %2029 = vmatprep.subr.mxu0 0.0
    %2030 = vmatpush2.msra.mxu0 0.0
    %2031 = vmatprep.subr.mxu0 0.0
    %2032 = vmatpush2.msra.mxu0 0.0
    %2033 = vmatprep.subr.mxu0 0.0
    %2034 = vmatpush2.msra.mxu0 0.0
    %2035 = vmatprep.subr.mxu0 0.0
    %2036 = vmatpush2.msra.mxu0 0.0
    %2037 = vmatprep.subr.mxu0 0.0
    %2038 = vmatpush2.msra.mxu0 0.0
    %2039 = vmatprep.subr.mxu0 0.0
    %2040 = vmatpush2.msra.mxu0 0.0
    %2041 = vmatprep.subr.mxu0 0.0
    %2042 = vmatpush2.msra.mxu0 0.0
    %2043 = vmatprep.mubr.f32.mxu0 0.0
    %2044 = vmatmul.mubr.f32.gmra.mxu0 %v1974
    %v2045 = vpop.f32.mrf.mxu0
    %v2046 = vadd.f32 %v1972, %v2045
    %v2047 = vpop.f32.mrf.mxu0
    %2048 = vmatprep.mubr.f32.mxu0 0.0
    %2049 = vmatmul.mubr.f32.gmra.mxu0 %v1977
    %v2050 = vpop.f32.mrf.mxu0
    %v2051 = vadd.f32 %v1972, %v2050
    %v2052 = vpop.f32.mrf.mxu0
    %2053 = vdwg.mxu0
    %v2054 = vmax.f32 %v2046, 0.0
    %v2055 = vmax.f32 %v2051, 0.0
    %v2056 = vld [vmem:[%s2 + $0x20] sm:$0xff]
    %v2057 = vld [vmem:[%s2 + $0x48] sm:$0xff]
    %v2058 = vld [vmem:[%s2 + $0x70] sm:$0xff]
    %v2059 = vld [vmem:[%s2 + $0x98] sm:$0xff]
    %v2060 = vld [vmem:[%s2 + $0xc0] sm:$0xff]
    %v2061 = vld [vmem:[%s2 + $0xe8] sm:$0xff]
    %v2062 = vld [vmem:[%s2 + $0x110] sm:$0xff]
    %v2063 = vld [vmem:[%s2 + $0x138] sm:$0xff]
    %v2064 = vld [vmem:[%s2 + $0x160] sm:$0xff]
    %v2065 = vld [vmem:[%s2 + $0x188] sm:$0xff]
    %v2066 = vld [vmem:[%s2 + $0x1b0] sm:$0xff]
    %v2067 = vld [vmem:[%s2 + $0x1d8] sm:$0xff]
    %v2068 = vld [vmem:[%s2 + $0x200] sm:$0xff]
    %v2069 = vld [vmem:[%s2 + $0x228] sm:$0xff]
    %v2070 = vld [vmem:[%s2 + $0x250] sm:$0xff]
    %v2071 = vld [vmem:[%s2 + $0x278] sm:$0xff]
    %v2072 = vld [vmem:[%s3 + $0x8] sm:$0x1]
    %v2073 = vlaneseq
    %v2074 = vshrl.u32 %v2073, 7
    %v2075 = vsub.s32 0, %v2074
    %v2076 = vrot.slane %v2072, %v2075
    %2077 = vmatprep.subr.mxu0 0.0
    %2078 = vmatpush1.msra.mxu0 %v2071
    %2079 = vmatprep.subr.mxu0 0.0
    %2080 = vmatpush1.msra.mxu0 %v2070
    %2081 = vmatprep.subr.mxu0 0.0
    %2082 = vmatpush1.msra.mxu0 %v2069
    %2083 = vmatprep.subr.mxu0 0.0
    %2084 = vmatpush1.msra.mxu0 %v2068
    %2085 = vmatprep.subr.mxu0 0.0
    %2086 = vmatpush1.msra.mxu0 %v2067
    %2087 = vmatprep.subr.mxu0 0.0
    %2088 = vmatpush1.msra.mxu0 %v2066
    %2089 = vmatprep.subr.mxu0 0.0
    %2090 = vmatpush1.msra.mxu0 %v2065
    %2091 = vmatprep.subr.mxu0 0.0
    %2092 = vmatpush1.msra.mxu0 %v2064
    %2093 = vmatprep.subr.mxu0 0.0
    %2094 = vmatpush1.msra.mxu0 %v2063
    %2095 = vmatprep.subr.mxu0 0.0
    %2096 = vmatpush1.msra.mxu0 %v2062
    %2097 = vmatprep.subr.mxu0 0.0
    %2098 = vmatpush1.msra.mxu0 %v2061
    %2099 = vmatprep.subr.mxu0 0.0
    %2100 = vmatpush1.msra.mxu0 %v2060
    %2101 = vmatprep.subr.mxu0 0.0
    %2102 = vmatpush1.msra.mxu0 %v2059
    %2103 = vmatprep.subr.mxu0 0.0
    %2104 = vmatpush1.msra.mxu0 %v2058
    %2105 = vmatprep.subr.mxu0 0.0
    %2106 = vmatpush1.msra.mxu0 %v2057
    %2107 = vmatprep.subr.mxu0 0.0
    %2108 = vmatpush1.msra.mxu0 %v2056
    %2109 = vmatprep.subr.mxu0 0.0
    %2110 = vmatpush2.msra.mxu0 0.0
    %2111 = vmatprep.subr.mxu0 0.0
    %2112 = vmatpush2.msra.mxu0 0.0
    %2113 = vmatprep.subr.mxu0 0.0
    %2114 = vmatpush2.msra.mxu0 0.0
    %2115 = vmatprep.subr.mxu0 0.0
    %2116 = vmatpush2.msra.mxu0 0.0
    %2117 = vmatprep.subr.mxu0 0.0
    %2118 = vmatpush2.msra.mxu0 0.0
    %2119 = vmatprep.subr.mxu0 0.0
    %2120 = vmatpush2.msra.mxu0 0.0
    %2121 = vmatprep.subr.mxu0 0.0
    %2122 = vmatpush2.msra.mxu0 0.0
    %2123 = vmatprep.subr.mxu0 0.0
    %2124 = vmatpush2.msra.mxu0 0.0
    %2125 = vmatprep.subr.mxu0 0.0
    %2126 = vmatpush2.msra.mxu0 0.0
    %2127 = vmatprep.subr.mxu0 0.0
    %2128 = vmatpush2.msra.mxu0 0.0
    %2129 = vmatprep.subr.mxu0 0.0
    %2130 = vmatpush2.msra.mxu0 0.0
    %2131 = vmatprep.subr.mxu0 0.0
    %2132 = vmatpush2.msra.mxu0 0.0
    %2133 = vmatprep.subr.mxu0 0.0
    %2134 = vmatpush2.msra.mxu0 0.0
    %2135 = vmatprep.subr.mxu0 0.0
    %2136 = vmatpush2.msra.mxu0 0.0
    %2137 = vmatprep.subr.mxu0 0.0
    %2138 = vmatpush2.msra.mxu0 0.0
    %2139 = vmatprep.subr.mxu0 0.0
    %2140 = vmatpush2.msra.mxu0 0.0
    %2141 = vmatprep.mubr.f32.mxu0 0.0
    %2142 = vmatmul.mubr.f32.gmra.mxu0 %v2054
    %v2143 = vpop.f32.mrf.mxu0
    %v2144 = vadd.f32 %v2076, %v2143
    %v2145 = vpop.f32.mrf.mxu0
    %2146 = vmatprep.mubr.f32.mxu0 0.0
    %2147 = vmatmul.mubr.f32.gmra.mxu0 %v2055
    %v2148 = vpop.f32.mrf.mxu0
    %v2149 = vadd.f32 %v2076, %v2148
    %v2150 = vpop.f32.mrf.mxu0
    %2151 = vdwg.mxu0
    %v2152 = vadd.f32 %v2144, %v1922
    %v2153 = vadd.f32 %v2149, %v1923
    %v2154 = vsel %vm116, %v2152, 0.0
    %2155 = vadd.xlane.f32.xlu0 %v2154
    %v2156 = vpop.xlane.xlu0 %2155
    %v2157 = vsel %vm116, %v2153, 0.0
    %2158 = vadd.xlane.f32.xlu0 %v2157
    %v2159 = vpop.xlane.xlu0 %2158
    %v2160 = vmul.f32 %v2156, %v123
    %v2161 = vmul.f32 %v2159, %v123
    %v2162 = vsub.f32 %v2152, %v2160
    %v2163 = vsub.f32 %v2153, %v2161
    %v2164 = vmul.f32 %v2162, %v2162
    %v2165 = vmul.f32 %v2163, %v2163
    %v2166 = vsel %vm116, %v2164, 0.0
    %2167 = vadd.xlane.f32.xlu0 %v2166
    %v2168 = vpop.xlane.xlu0 %2167
    %v2169 = vsel %vm116, %v2165, 0.0
    %2170 = vadd.xlane.f32.xlu0 %v2169
    %v2171 = vpop.xlane.xlu0 %2170
    %v2172 = vmul.f32 %v2168, %v123
    %v2173 = vmul.f32 %v2171, %v123
    %v2174 = vadd.f32 %v2172, 1e-06
    %v2175 = vadd.f32 %v2173, 1e-06
    %v2176 = vrsqrt.pop %v2174
    %v2177 = vrsqrt.pop %v2175
    %v2178 = vmul.f32 %v2162, %v2176
    %v2179 = vmul.f32 %v2163, %v2177
    %v2180 = vld [vmem:[%s3 + $0x9] sm:$0x1]
    %v2181 = vlaneseq
    %v2182 = vshrl.u32 %v2181, 7
    %v2183 = vsub.s32 0, %v2182
    %v2184 = vrot.slane %v2180, %v2183
    %v2185 = vmul.f32 %v2178, %v2184
    %v2186 = vmul.f32 %v2179, %v2184
    %v2187 = vld [vmem:[%s3 + $0xa] sm:$0x1]
    %v2188 = vlaneseq
    %v2189 = vshrl.u32 %v2188, 7
    %v2190 = vsub.s32 0, %v2189
    %v2191 = vrot.slane %v2187, %v2190
    %v2192 = vadd.f32 %v2185, %v2191
    %v2193 = vadd.f32 %v2186, %v2191
    %2194 = vst.msk [vmem:[#allocation2] sm:$0xff] %vm116, %v2192
    %2195 = vst.msk [vmem:[#allocation2 + $0x8] sm:$0xff] %vm116, %v2193
    // Predicated region
    $region18: #{refine_encoder.1} parent=1 // pred_check
      _
    $region19: #{refine_encoder.1} parent=1 // pred_check_branch
      %2197 = sbr.rel (0) target = $region21
    $region20: #{refine_encoder.1} parent=1 // pred_region
      %s2199 = ssub.s32 256, 256
      %2200 = vsyncadd [#allocation3], %s2199
      %s2201 = sshll.u32 [#allocation2], 4
      %s2202 = int_to_ptr.vmem [resolvable:$true] %s2201
      %2207 = dma.vmem_to_hbm [thread:$0]  %s2202, 256, %s4, [#allocation3], 128, 128, 8
    $region21: #{refine_encoder.1} parent=1 // pred_fallthru
      _
    // Predicated region
    $region22: #{refine_encoder.1} parent=1 // pred_check
      _
    $region23: #{refine_encoder.1} parent=1 // pred_check_branch
      %2209 = sbr.rel (0) target = $region25
    $region24: #{refine_encoder.1} parent=1 // pred_region
      %2210 = dma.done [#allocation3], 256
    $region25: #{refine_encoder.1} parent=1 // pred_fallthru
      _
    %2211 = vsyncpa [#allocation3], 1

</llo_original>
